<compile_context>
chip_gen: v5e
topology: v5e:2x2
jax: 0.10.0
libtpu: 0.0.40
codegen_flags: <defaults>
</compile_context>

<pallas_src>
import functools
import math

import jax
import jax.numpy as jnp
from jax import lax
from jax.experimental import pallas as pl
from jax.experimental.pallas import tpu as pltpu


_EPS = 1e-5
_SQRT_HALF = 1.0 / math.sqrt(2.0)


def _gelu_exact(x):
    # Exact (erf-based) GELU -- matches PyTorch F.gelu default.
    return 0.5 * x * (1.0 + lax.erf(x * _SQRT_HALF))


# ------------------------------ fused kernel -------------------------------- #

def _fused_kernel(f_ref, w1_ref, g_ref, b_ref, w2_ref, b2_ref, w3_ref, b3_ref,
                  o_ref, h_scr, *, L1, L3, dim):
    f32 = jnp.float32
    Pe = L3 + 1                                   # even y2 rows needed by conv3

    # ---- conv1: single K=128 contraction per mod-6 plane, + tanh ------------
    # ---- single-pass GroupNorm stats (padded rows are exactly zero) ---------
    s1 = jnp.float32(0.0)
    s2 = jnp.float32(0.0)
    for j in range(6):
        hj = jnp.tanh(jnp.dot(f_ref[0, j], w1_ref[...],
                              preferred_element_type=f32))        # (Lg6, dim) f32
        s1 = s1 + jnp.sum(hj)
        s2 = s2 + jnp.sum(hj * hj)
        h_scr[j] = hj.astype(h_scr.dtype)

    # ---- GroupNorm(num_groups=1) + affine folded into one FMA ---------------
    n = jnp.float32(L1 * dim)
    mean = s1 / n
    var = s2 / n - mean * mean
    a = lax.rsqrt(var + _EPS) * g_ref[...]        # (1, dim) f32
    c = b_ref[...] - mean * a                     # (1, dim) f32
    for j in range(6):
        h_scr[j] = (h_scr[j].astype(f32) * a + c).astype(h_scr.dtype)

    # ---- conv2 (k=7, s=3): 7 contiguous matmuls for even rows, 7 for odd ----
    # even output row 2p uses y1 rows 6p..6p+6  -> planes 0..5 @ p, plane 0 @ p+1
    # odd  output row 2p+1 uses y1 rows 6p+3..6p+9
    def c2(plane, start, size, tap):
        x = h_scr[plane, start:start + size, :]                   # (size, dim) bf16
        return jnp.dot(x, w2_ref[tap], preferred_element_type=f32)

    ze = c2(0, 0, Pe, 0)
    for j in range(1, 6):
        ze = ze + c2(j, 0, Pe, j)
    ze = ze + c2(0, 1, Pe, 6)
    ye = _gelu_exact(ze + b2_ref[...]).astype(h_scr.dtype)        # (Pe, 2dim) even y2

    zo = c2(3, 0, L3, 0) + c2(4, 0, L3, 1) + c2(5, 0, L3, 2)
    zo = zo + c2(0, 1, L3, 3) + c2(1, 1, L3, 4) + c2(2, 1, L3, 5)
    zo = zo + c2(3, 1, L3, 6)
    yo = _gelu_exact(zo + b2_ref[...]).astype(h_scr.dtype)        # (L3, 2dim) odd y2

    # ---- conv3 (k=3, s=2): 3 contiguous matmuls + bias + GELU ---------------
    z3 = jnp.dot(ye[0:L3], w3_ref[0], preferred_element_type=f32)
    z3 = z3 + jnp.dot(yo, w3_ref[1], preferred_element_type=f32)
    z3 = z3 + jnp.dot(ye[1:L3 + 1], w3_ref[2], preferred_element_type=f32)
    o_ref[0] = _gelu_exact(z3 + b3_ref[...]).astype(o_ref.dtype)  # (L3, dim)


# --------------------------- parameter preparation -------------------------- #

def prepare_params(params, compute_dtype=jnp.bfloat16):
    """One-time transpose / zero-pad / cast of the conv weights."""
    dim = params["w1"].shape[0]
    f32 = jnp.float32

    # conv1 (dim, 1, 127) -> (128, dim) with tap row 127 zeroed (K=128 dot).
    w1_t = jnp.transpose(params["w1"][:, 0, :], (1, 0)).astype(f32)   # (127, dim)
    w1 = jnp.concatenate([w1_t, jnp.zeros((1, dim), f32)],
                         axis=0).astype(compute_dtype)                # (128, dim)

    # conv2 (2dim, dim, 7) -> (7, dim, 2dim) per-tap blocks (no zero padding).
    w2 = jnp.transpose(params["w2"], (2, 1, 0)).astype(compute_dtype)

    # conv3 (dim, 2dim, 3) -> (3, 2dim, dim) per-tap blocks.
    w3 = jnp.transpose(params["w3"], (2, 1, 0)).astype(compute_dtype)

    return {
        "w1": w1,
        "gamma": params["gamma"].reshape(1, dim).astype(f32),
        "beta": params["beta"].reshape(1, dim).astype(f32),
        "w2": w2,
        "b2": params["b2"].reshape(1, 2 * dim).astype(f32),
        "w3": w3,
        "b3": params["b3"].reshape(1, dim).astype(f32),
    }


# ------------------------------- forward pass ------------------------------- #

def audio_preprocessor(x, prep):
    """x: (B, 1, L) float32 (PyTorch NCW).  Returns (B, dim, L3) float32."""
    B, _, L = x.shape
    dim = prep["w1"].shape[1]
    cdtype = prep["w1"].dtype

    L1 = (L - 127) // 64 + 1
    L2 = (L1 - 7) // 3 + 1
    L3 = (L2 - 3) // 2 + 1
    Lg6 = L3 + 2                      # rows per mod-6 residue plane
    n_rows = 6 * Lg6                  # >= L1 by construction of L2/L3

    # Overlapping 128-sample frames at stride 64 (tap row 127 of w1 is zero),
    # built from non-overlapping 64-sample halves: exactly ~2x |x| HBM bytes.
    sig = x[:, 0, :]
    need = 64 * (L1 + 1)
    sig = sig[:, :need] if L >= need else jnp.pad(sig, ((0, 0), (0, need - L)))
    r64 = sig.reshape(B, L1 + 1, 64)
    frames = jnp.concatenate([r64[:, :L1, :], r64[:, 1:L1 + 1, :]],
                             axis=-1).astype(cdtype)              # (B, L1, 128)
    # Zero-pad past the valid conv1 rows (keeps GroupNorm stats exact), then
    # de-interleave by residue mod 6 so the strided convs downstream only need
    # contiguous row slices of in-VMEM data.
    frames = jnp.pad(frames, ((0, 0), (0, n_rows - L1), (0, 0)))
    frames = frames.reshape(B, Lg6, 6, 128).transpose(0, 2, 1, 3)  # (B, 6, Lg6, 128)

    # 48 MiB: above v5e/v6e scoped defaults, below v7x's 64 MiB physical VMEM.
    vmem_cap = 48 * 1024 * 1024

    y3 = pl.pallas_call(
        functools.partial(_fused_kernel, L1=L1, L3=L3, dim=dim),
        out_shape=jax.ShapeDtypeStruct((B, L3, dim), jnp.float32),
        grid_spec=pltpu.PrefetchScalarGridSpec(
            num_scalar_prefetch=0,
            grid=(B,),
            in_specs=[
                pl.BlockSpec((1, 6, Lg6, 128), lambda b: (b, 0, 0, 0)),
                pl.BlockSpec((128, dim), lambda b: (0, 0)),
                pl.BlockSpec((1, dim), lambda b: (0, 0)),
                pl.BlockSpec((1, dim), lambda b: (0, 0)),
                pl.BlockSpec((7, dim, 2 * dim), lambda b: (0, 0, 0)),
                pl.BlockSpec((1, 2 * dim), lambda b: (0, 0)),
                pl.BlockSpec((3, 2 * dim, dim), lambda b: (0, 0, 0)),
                pl.BlockSpec((1, dim), lambda b: (0, 0)),
            ],
            out_specs=pl.BlockSpec((1, L3, dim), lambda b: (b, 0, 0)),
            scratch_shapes=[pltpu.VMEM((6, Lg6, dim), jnp.bfloat16)],
        ),
        compiler_params=pltpu.CompilerParams(
            dimension_semantics=("parallel",), vmem_limit_bytes=vmem_cap),
    )(frames, prep["w1"], prep["gamma"], prep["beta"],
      prep["w2"], prep["b2"], prep["w3"], prep["b3"])

    return jnp.transpose(y3, (0, 2, 1))            # (B, dim, L3) f32


# --------------------------- pure-JAX reference ----------------------------- #

def reference(x, params):
    dn = ("NCH", "OIH", "NCH")
    y = lax.conv_general_dilated(x, params["w1"], (64,), "VALID", dimension_numbers=dn)
    y = jnp.tanh(y)
    mean = jnp.mean(y, axis=(1, 2), keepdims=True)
    var = jnp.mean((y - mean) ** 2, axis=(1, 2), keepdims=True)
    y = (y - mean) * lax.rsqrt(var + _EPS)
    y = y * params["gamma"][None, :, None] + params["beta"][None, :, None]
    y = lax.conv_general_dilated(y, params["w2"], (3,), "VALID", dimension_numbers=dn)
    y = _gelu_exact(y + params["b2"][None, :, None])
    y = lax.conv_general_dilated(y, params["w3"], (2,), "VALID", dimension_numbers=dn)
    y = _gelu_exact(y + params["b3"][None, :, None])
    return y


if __name__ == "__main__":
    dim = 32                       # scaled-down version of the default dim=288
    B = 2
    L = 127 + 64 * 30              # -> L1=31, L2=9, L3=4

    key = jax.random.PRNGKey(0)
    ks = jax.random.split(key, 8)
    params = {
        "w1":    0.05 * jax.random.normal(ks[0], (dim, 1, 127), jnp.float32),
        "gamma": 1.0 + 0.1 * jax.random.normal(ks[1], (dim,), jnp.float32),
        "beta":  0.1 * jax.random.normal(ks[2], (dim,), jnp.float32),
        "w2":    0.05 * jax.random.normal(ks[3], (2 * dim, dim, 7), jnp.float32),
        "b2":    0.1 * jax.random.normal(ks[4], (2 * dim,), jnp.float32),
        "w3":    0.05 * jax.random.normal(ks[5], (dim, 2 * dim, 3), jnp.float32),
        "b3":    0.1 * jax.random.normal(ks[6], (dim,), jnp.float32),
    }
    x = jax.random.normal(ks[7], (B, 1, L), jnp.float32)

    prep = prepare_params(params)
    out = jax.block_until_ready(audio_preprocessor(x, prep))
    ref = jax.block_until_ready(reference(x, params))

    assert out.shape == ref.shape == (B, dim, 4), (out.shape, ref.shape)
    max_err = float(jnp.max(jnp.abs(out - ref)))
    assert bool(jnp.allclose(out, ref, atol=2e-2, rtol=2e-2)), max_err
    print("KERNEL_OK")
</pallas_src>

<mosaic_0001>
module attributes {stable_mosaic.version = 11 : i64} {
  func.func @_fused_kernel(%arg0: i32, %arg1: memref<1x6x6x128xbf16, #tpu.memory_space<vmem>>, %arg2: memref<128x32xbf16, #tpu.memory_space<vmem>>, %arg3: memref<1x32xf32, #tpu.memory_space<vmem>>, %arg4: memref<1x32xf32, #tpu.memory_space<vmem>>, %arg5: memref<7x32x64xbf16, #tpu.memory_space<vmem>>, %arg6: memref<1x64xf32, #tpu.memory_space<vmem>>, %arg7: memref<3x64x32xbf16, #tpu.memory_space<vmem>>, %arg8: memref<1x32xf32, #tpu.memory_space<vmem>>, %arg9: memref<1x4x32xf32, #tpu.memory_space<vmem>>, %arg10: memref<6x6x32xbf16, #tpu.memory_space<vmem>>) attributes {dimension_semantics = [#tpu.dimension_semantics<parallel>], iteration_bounds = array<i64: 2>, scalar_prefetch = 0 : i64, scratch_operands = 1 : i64, tpu.core_type = #tpu.core_type<tc>, window_params = [{transform_indices = @transform_0, window_bounds = array<i64: 1, 6, 6, 128>}, {pipeline_mode = #tpu.pipeline_mode<synchronous>, transform_indices = @transform_1, window_bounds = array<i64: 128, 32>}, {pipeline_mode = #tpu.pipeline_mode<synchronous>, transform_indices = @transform_2, window_bounds = array<i64: 1, 32>}, {pipeline_mode = #tpu.pipeline_mode<synchronous>, transform_indices = @transform_3, window_bounds = array<i64: 1, 32>}, {pipeline_mode = #tpu.pipeline_mode<synchronous>, transform_indices = @transform_4, window_bounds = array<i64: 7, 32, 64>}, {pipeline_mode = #tpu.pipeline_mode<synchronous>, transform_indices = @transform_5, window_bounds = array<i64: 1, 64>}, {pipeline_mode = #tpu.pipeline_mode<synchronous>, transform_indices = @transform_6, window_bounds = array<i64: 3, 64, 32>}, {pipeline_mode = #tpu.pipeline_mode<synchronous>, transform_indices = @transform_7, window_bounds = array<i64: 1, 32>}, {transform_indices = @transform_8, window_bounds = array<i64: 1, 4, 32>}]} {
    %c0 = arith.constant 0 : index
    %c0_0 = arith.constant 0 : index
    %c0_1 = arith.constant 0 : index
    %c0_2 = arith.constant 0 : index
    %0 = vector.load %arg1[%c0, %c0_0, %c0_1, %c0_2] : memref<1x6x6x128xbf16, #tpu.memory_space<vmem>>, vector<1x1x6x128xbf16>
    %1 = vector.shape_cast %0 : vector<1x1x6x128xbf16> to vector<6x128xbf16>
    %c0_3 = arith.constant 0 : index
    %c0_4 = arith.constant 0 : index
    %2 = vector.load %arg2[%c0_3, %c0_4] : memref<128x32xbf16, #tpu.memory_space<vmem>>, vector<128x32xbf16>
    %cst = arith.constant dense<0.000000e+00> : vector<6x32xf32>
    %3 = tpu.matmul %1, %2, %cst {dimension_numbers = #tpu.dot_dimension_numbers<[1], [0], [0], [1], [0, 0, 1, 1], [], []>} : vector<6x128xbf16>, vector<128x32xbf16>, vector<6x32xf32> -> vector<6x32xf32>
    %4 = math.tanh %3 : vector<6x32xf32>
    %5 = vector.shape_cast %4 : vector<6x32xf32> to vector<1x6x32xf32>
    %cst_5 = arith.constant dense<0.000000e+00> : vector<1xf32>
    %6 = vector.multi_reduction <add>, %5, %cst_5 [1, 2] : vector<1x6x32xf32> to vector<1xf32>
    %7 = vector.shape_cast %6 : vector<1xf32> to vector<1x1x1xf32>
    %8 = vector.extract %7[0, 0, 0] : f32 from vector<1x1x1xf32>
    %cst_6 = arith.constant 0.000000e+00 : f32
    %9 = arith.addf %cst_6, %8 : f32
    %10 = arith.mulf %4, %4 : vector<6x32xf32>
    %11 = vector.shape_cast %10 : vector<6x32xf32> to vector<1x6x32xf32>
    %cst_7 = arith.constant dense<0.000000e+00> : vector<1xf32>
    %12 = vector.multi_reduction <add>, %11, %cst_7 [1, 2] : vector<1x6x32xf32> to vector<1xf32>
    %13 = vector.shape_cast %12 : vector<1xf32> to vector<1x1x1xf32>
    %14 = vector.extract %13[0, 0, 0] : f32 from vector<1x1x1xf32>
    %cst_8 = arith.constant 0.000000e+00 : f32
    %15 = arith.addf %cst_8, %14 : f32
    %16 = arith.truncf %4 : vector<6x32xf32> to vector<6x32xbf16>
    %c0_9 = arith.constant 0 : index
    %c0_10 = arith.constant 0 : index
    %c0_11 = arith.constant 0 : index
    %17 = vector.load %arg10[%c0_9, %c0_10, %c0_11] : memref<6x6x32xbf16, #tpu.memory_space<vmem>>, vector<1x6x32xbf16>
    %18 = vector.shape_cast %17 : vector<1x6x32xbf16> to vector<6x32xbf16>
    %19 = vector.shape_cast %16 : vector<6x32xbf16> to vector<1x6x32xbf16>
    tpu.vector_store %arg10[%c0_9, %c0_10, %c0_11], %19 {strides = array<i32>} : memref<6x6x32xbf16, #tpu.memory_space<vmem>>, vector<1x6x32xbf16>,
    %c0_12 = arith.constant 0 : index
    %c1 = arith.constant 1 : index
    %c0_13 = arith.constant 0 : index
    %c0_14 = arith.constant 0 : index
    %20 = vector.load %arg1[%c0_12, %c1, %c0_13, %c0_14] : memref<1x6x6x128xbf16, #tpu.memory_space<vmem>>, vector<1x1x6x128xbf16>
    %21 = vector.shape_cast %20 : vector<1x1x6x128xbf16> to vector<6x128xbf16>
    %c0_15 = arith.constant 0 : index
    %c0_16 = arith.constant 0 : index
    %22 = vector.load %arg2[%c0_15, %c0_16] : memref<128x32xbf16, #tpu.memory_space<vmem>>, vector<128x32xbf16>
    %cst_17 = arith.constant dense<0.000000e+00> : vector<6x32xf32>
    %23 = tpu.matmul %21, %22, %cst_17 {dimension_numbers = #tpu.dot_dimension_numbers<[1], [0], [0], [1], [0, 0, 1, 1], [], []>} : vector<6x128xbf16>, vector<128x32xbf16>, vector<6x32xf32> -> vector<6x32xf32>
    %24 = math.tanh %23 : vector<6x32xf32>
    %25 = vector.shape_cast %24 : vector<6x32xf32> to vector<1x6x32xf32>
    %cst_18 = arith.constant dense<0.000000e+00> : vector<1xf32>
    %26 = vector.multi_reduction <add>, %25, %cst_18 [1, 2] : vector<1x6x32xf32> to vector<1xf32>
    %27 = vector.shape_cast %26 : vector<1xf32> to vector<1x1x1xf32>
    %28 = vector.extract %27[0, 0, 0] : f32 from vector<1x1x1xf32>
    %29 = arith.addf %9, %28 : f32
    %30 = arith.mulf %24, %24 : vector<6x32xf32>
    %31 = vector.shape_cast %30 : vector<6x32xf32> to vector<1x6x32xf32>
    %cst_19 = arith.constant dense<0.000000e+00> : vector<1xf32>
    %32 = vector.multi_reduction <add>, %31, %cst_19 [1, 2] : vector<1x6x32xf32> to vector<1xf32>
    %33 = vector.shape_cast %32 : vector<1xf32> to vector<1x1x1xf32>
    %34 = vector.extract %33[0, 0, 0] : f32 from vector<1x1x1xf32>
    %35 = arith.addf %15, %34 : f32
    %36 = arith.truncf %24 : vector<6x32xf32> to vector<6x32xbf16>
    %c1_20 = arith.constant 1 : index
    %c0_21 = arith.constant 0 : index
    %c0_22 = arith.constant 0 : index
    %37 = vector.load %arg10[%c1_20, %c0_21, %c0_22] : memref<6x6x32xbf16, #tpu.memory_space<vmem>>, vector<1x6x32xbf16>
    %38 = vector.shape_cast %37 : vector<1x6x32xbf16> to vector<6x32xbf16>
    %39 = vector.shape_cast %36 : vector<6x32xbf16> to vector<1x6x32xbf16>
    tpu.vector_store %arg10[%c1_20, %c0_21, %c0_22], %39 {strides = array<i32>} : memref<6x6x32xbf16, #tpu.memory_space<vmem>>, vector<1x6x32xbf16>,
    %c0_23 = arith.constant 0 : index
    %c2 = arith.constant 2 : index
    %c0_24 = arith.constant 0 : index
    %c0_25 = arith.constant 0 : index
    %40 = vector.load %arg1[%c0_23, %c2, %c0_24, %c0_25] : memref<1x6x6x128xbf16, #tpu.memory_space<vmem>>, vector<1x1x6x128xbf16>
    %41 = vector.shape_cast %40 : vector<1x1x6x128xbf16> to vector<6x128xbf16>
    %c0_26 = arith.constant 0 : index
    %c0_27 = arith.constant 0 : index
    %42 = vector.load %arg2[%c0_26, %c0_27] : memref<128x32xbf16, #tpu.memory_space<vmem>>, vector<128x32xbf16>
    %cst_28 = arith.constant dense<0.000000e+00> : vector<6x32xf32>
    %43 = tpu.matmul %41, %42, %cst_28 {dimension_numbers = #tpu.dot_dimension_numbers<[1], [0], [0], [1], [0, 0, 1, 1], [], []>} : vector<6x128xbf16>, vector<128x32xbf16>, vector<6x32xf32> -> vector<6x32xf32>
    %44 = math.tanh %43 : vector<6x32xf32>
    %45 = vector.shape_cast %44 : vector<6x32xf32> to vector<1x6x32xf32>
    %cst_29 = arith.constant dense<0.000000e+00> : vector<1xf32>
    %46 = vector.multi_reduction <add>, %45, %cst_29 [1, 2] : vector<1x6x32xf32> to vector<1xf32>
    %47 = vector.shape_cast %46 : vector<1xf32> to vector<1x1x1xf32>
    %48 = vector.extract %47[0, 0, 0] : f32 from vector<1x1x1xf32>
    %49 = arith.addf %29, %48 : f32
    %50 = arith.mulf %44, %44 : vector<6x32xf32>
    %51 = vector.shape_cast %50 : vector<6x32xf32> to vector<1x6x32xf32>
    %cst_30 = arith.constant dense<0.000000e+00> : vector<1xf32>
    %52 = vector.multi_reduction <add>, %51, %cst_30 [1, 2] : vector<1x6x32xf32> to vector<1xf32>
    %53 = vector.shape_cast %52 : vector<1xf32> to vector<1x1x1xf32>
    %54 = vector.extract %53[0, 0, 0] : f32 from vector<1x1x1xf32>
    %55 = arith.addf %35, %54 : f32
    %56 = arith.truncf %44 : vector<6x32xf32> to vector<6x32xbf16>
    %c2_31 = arith.constant 2 : index
    %c0_32 = arith.constant 0 : index
    %c0_33 = arith.constant 0 : index
    %57 = vector.load %arg10[%c2_31, %c0_32, %c0_33] : memref<6x6x32xbf16, #tpu.memory_space<vmem>>, vector<1x6x32xbf16>
    %58 = vector.shape_cast %57 : vector<1x6x32xbf16> to vector<6x32xbf16>
    %59 = vector.shape_cast %56 : vector<6x32xbf16> to vector<1x6x32xbf16>
    tpu.vector_store %arg10[%c2_31, %c0_32, %c0_33], %59 {strides = array<i32>} : memref<6x6x32xbf16, #tpu.memory_space<vmem>>, vector<1x6x32xbf16>,
    %c0_34 = arith.constant 0 : index
    %c3 = arith.constant 3 : index
    %c0_35 = arith.constant 0 : index
    %c0_36 = arith.constant 0 : index
    %60 = vector.load %arg1[%c0_34, %c3, %c0_35, %c0_36] : memref<1x6x6x128xbf16, #tpu.memory_space<vmem>>, vector<1x1x6x128xbf16>
    %61 = vector.shape_cast %60 : vector<1x1x6x128xbf16> to vector<6x128xbf16>
    %c0_37 = arith.constant 0 : index
    %c0_38 = arith.constant 0 : index
    %62 = vector.load %arg2[%c0_37, %c0_38] : memref<128x32xbf16, #tpu.memory_space<vmem>>, vector<128x32xbf16>
    %cst_39 = arith.constant dense<0.000000e+00> : vector<6x32xf32>
    %63 = tpu.matmul %61, %62, %cst_39 {dimension_numbers = #tpu.dot_dimension_numbers<[1], [0], [0], [1], [0, 0, 1, 1], [], []>} : vector<6x128xbf16>, vector<128x32xbf16>, vector<6x32xf32> -> vector<6x32xf32>
    %64 = math.tanh %63 : vector<6x32xf32>
    %65 = vector.shape_cast %64 : vector<6x32xf32> to vector<1x6x32xf32>
    %cst_40 = arith.constant dense<0.000000e+00> : vector<1xf32>
    %66 = vector.multi_reduction <add>, %65, %cst_40 [1, 2] : vector<1x6x32xf32> to vector<1xf32>
    %67 = vector.shape_cast %66 : vector<1xf32> to vector<1x1x1xf32>
    %68 = vector.extract %67[0, 0, 0] : f32 from vector<1x1x1xf32>
    %69 = arith.addf %49, %68 : f32
    %70 = arith.mulf %64, %64 : vector<6x32xf32>
    %71 = vector.shape_cast %70 : vector<6x32xf32> to vector<1x6x32xf32>
    %cst_41 = arith.constant dense<0.000000e+00> : vector<1xf32>
    %72 = vector.multi_reduction <add>, %71, %cst_41 [1, 2] : vector<1x6x32xf32> to vector<1xf32>
    %73 = vector.shape_cast %72 : vector<1xf32> to vector<1x1x1xf32>
    %74 = vector.extract %73[0, 0, 0] : f32 from vector<1x1x1xf32>
    %75 = arith.addf %55, %74 : f32
    %76 = arith.truncf %64 : vector<6x32xf32> to vector<6x32xbf16>
    %c3_42 = arith.constant 3 : index
    %c0_43 = arith.constant 0 : index
    %c0_44 = arith.constant 0 : index
    %77 = vector.load %arg10[%c3_42, %c0_43, %c0_44] : memref<6x6x32xbf16, #tpu.memory_space<vmem>>, vector<1x6x32xbf16>
    %78 = vector.shape_cast %77 : vector<1x6x32xbf16> to vector<6x32xbf16>
    %79 = vector.shape_cast %76 : vector<6x32xbf16> to vector<1x6x32xbf16>
    tpu.vector_store %arg10[%c3_42, %c0_43, %c0_44], %79 {strides = array<i32>} : memref<6x6x32xbf16, #tpu.memory_space<vmem>>, vector<1x6x32xbf16>,
    %c0_45 = arith.constant 0 : index
    %c4 = arith.constant 4 : index
    %c0_46 = arith.constant 0 : index
    %c0_47 = arith.constant 0 : index
    %80 = vector.load %arg1[%c0_45, %c4, %c0_46, %c0_47] : memref<1x6x6x128xbf16, #tpu.memory_space<vmem>>, vector<1x1x6x128xbf16>
    %81 = vector.shape_cast %80 : vector<1x1x6x128xbf16> to vector<6x128xbf16>
    %c0_48 = arith.constant 0 : index
    %c0_49 = arith.constant 0 : index
    %82 = vector.load %arg2[%c0_48, %c0_49] : memref<128x32xbf16, #tpu.memory_space<vmem>>, vector<128x32xbf16>
    %cst_50 = arith.constant dense<0.000000e+00> : vector<6x32xf32>
    %83 = tpu.matmul %81, %82, %cst_50 {dimension_numbers = #tpu.dot_dimension_numbers<[1], [0], [0], [1], [0, 0, 1, 1], [], []>} : vector<6x128xbf16>, vector<128x32xbf16>, vector<6x32xf32> -> vector<6x32xf32>
    %84 = math.tanh %83 : vector<6x32xf32>
    %85 = vector.shape_cast %84 : vector<6x32xf32> to vector<1x6x32xf32>
    %cst_51 = arith.constant dense<0.000000e+00> : vector<1xf32>
    %86 = vector.multi_reduction <add>, %85, %cst_51 [1, 2] : vector<1x6x32xf32> to vector<1xf32>
    %87 = vector.shape_cast %86 : vector<1xf32> to vector<1x1x1xf32>
    %88 = vector.extract %87[0, 0, 0] : f32 from vector<1x1x1xf32>
    %89 = arith.addf %69, %88 : f32
    %90 = arith.mulf %84, %84 : vector<6x32xf32>
    %91 = vector.shape_cast %90 : vector<6x32xf32> to vector<1x6x32xf32>
    %cst_52 = arith.constant dense<0.000000e+00> : vector<1xf32>
    %92 = vector.multi_reduction <add>, %91, %cst_52 [1, 2] : vector<1x6x32xf32> to vector<1xf32>
    %93 = vector.shape_cast %92 : vector<1xf32> to vector<1x1x1xf32>
    %94 = vector.extract %93[0, 0, 0] : f32 from vector<1x1x1xf32>
    %95 = arith.addf %75, %94 : f32
    %96 = arith.truncf %84 : vector<6x32xf32> to vector<6x32xbf16>
    %c4_53 = arith.constant 4 : index
    %c0_54 = arith.constant 0 : index
    %c0_55 = arith.constant 0 : index
    %97 = vector.load %arg10[%c4_53, %c0_54, %c0_55] : memref<6x6x32xbf16, #tpu.memory_space<vmem>>, vector<1x6x32xbf16>
    %98 = vector.shape_cast %97 : vector<1x6x32xbf16> to vector<6x32xbf16>
    %99 = vector.shape_cast %96 : vector<6x32xbf16> to vector<1x6x32xbf16>
    tpu.vector_store %arg10[%c4_53, %c0_54, %c0_55], %99 {strides = array<i32>} : memref<6x6x32xbf16, #tpu.memory_space<vmem>>, vector<1x6x32xbf16>,
    %c0_56 = arith.constant 0 : index
    %c5 = arith.constant 5 : index
    %c0_57 = arith.constant 0 : index
    %c0_58 = arith.constant 0 : index
    %100 = vector.load %arg1[%c0_56, %c5, %c0_57, %c0_58] : memref<1x6x6x128xbf16, #tpu.memory_space<vmem>>, vector<1x1x6x128xbf16>
    %101 = vector.shape_cast %100 : vector<1x1x6x128xbf16> to vector<6x128xbf16>
    %c0_59 = arith.constant 0 : index
    %c0_60 = arith.constant 0 : index
    %102 = vector.load %arg2[%c0_59, %c0_60] : memref<128x32xbf16, #tpu.memory_space<vmem>>, vector<128x32xbf16>
    %cst_61 = arith.constant dense<0.000000e+00> : vector<6x32xf32>
    %103 = tpu.matmul %101, %102, %cst_61 {dimension_numbers = #tpu.dot_dimension_numbers<[1], [0], [0], [1], [0, 0, 1, 1], [], []>} : vector<6x128xbf16>, vector<128x32xbf16>, vector<6x32xf32> -> vector<6x32xf32>
    %104 = math.tanh %103 : vector<6x32xf32>
    %105 = vector.shape_cast %104 : vector<6x32xf32> to vector<1x6x32xf32>
    %cst_62 = arith.constant dense<0.000000e+00> : vector<1xf32>
    %106 = vector.multi_reduction <add>, %105, %cst_62 [1, 2] : vector<1x6x32xf32> to vector<1xf32>
    %107 = vector.shape_cast %106 : vector<1xf32> to vector<1x1x1xf32>
    %108 = vector.extract %107[0, 0, 0] : f32 from vector<1x1x1xf32>
    %109 = arith.addf %89, %108 : f32
    %110 = arith.mulf %104, %104 : vector<6x32xf32>
    %111 = vector.shape_cast %110 : vector<6x32xf32> to vector<1x6x32xf32>
    %cst_63 = arith.constant dense<0.000000e+00> : vector<1xf32>
    %112 = vector.multi_reduction <add>, %111, %cst_63 [1, 2] : vector<1x6x32xf32> to vector<1xf32>
    %113 = vector.shape_cast %112 : vector<1xf32> to vector<1x1x1xf32>
    %114 = vector.extract %113[0, 0, 0] : f32 from vector<1x1x1xf32>
    %115 = arith.addf %95, %114 : f32
    %116 = arith.truncf %104 : vector<6x32xf32> to vector<6x32xbf16>
    %c5_64 = arith.constant 5 : index
    %c0_65 = arith.constant 0 : index
    %c0_66 = arith.constant 0 : index
    %117 = vector.load %arg10[%c5_64, %c0_65, %c0_66] : memref<6x6x32xbf16, #tpu.memory_space<vmem>>, vector<1x6x32xbf16>
    %118 = vector.shape_cast %117 : vector<1x6x32xbf16> to vector<6x32xbf16>
    %119 = vector.shape_cast %116 : vector<6x32xbf16> to vector<1x6x32xbf16>
    tpu.vector_store %arg10[%c5_64, %c0_65, %c0_66], %119 {strides = array<i32>} : memref<6x6x32xbf16, #tpu.memory_space<vmem>>, vector<1x6x32xbf16>,
    %cst_67 = arith.constant 9.920000e+02 : f32
    %120 = arith.divf %109, %cst_67 : f32
    %cst_68 = arith.constant 9.920000e+02 : f32
    %121 = arith.divf %115, %cst_68 : f32
    %122 = arith.mulf %120, %120 : f32
    %123 = arith.subf %121, %122 : f32
    %cst_69 = arith.constant 9.99999974E-6 : f32
    %124 = arith.addf %123, %cst_69 : f32
    %125 = math.rsqrt %124 : f32
    %c0_70 = arith.constant 0 : index
    %c0_71 = arith.constant 0 : index
    %126 = vector.load %arg3[%c0_70, %c0_71] : memref<1x32xf32, #tpu.memory_space<vmem>>, vector<1x32xf32>
    %127 = vector.broadcast %125 : f32 to vector<1x32xf32>
    %128 = arith.mulf %127, %126 : vector<1x32xf32>
    %c0_72 = arith.constant 0 : index
    %c0_73 = arith.constant 0 : index
    %129 = vector.load %arg4[%c0_72, %c0_73] : memref<1x32xf32, #tpu.memory_space<vmem>>, vector<1x32xf32>
    %130 = vector.broadcast %120 : f32 to vector<1x32xf32>
    %131 = arith.mulf %130, %128 : vector<1x32xf32>
    %132 = arith.subf %129, %131 : vector<1x32xf32>
    %c0_74 = arith.constant 0 : index
    %c0_75 = arith.constant 0 : index
    %c0_76 = arith.constant 0 : index
    %133 = vector.load %arg10[%c0_74, %c0_75, %c0_76] : memref<6x6x32xbf16, #tpu.memory_space<vmem>>, vector<1x6x32xbf16>
    %134 = vector.shape_cast %133 : vector<1x6x32xbf16> to vector<6x32xbf16>
    %135 = arith.extf %134 : vector<6x32xbf16> to vector<6x32xf32>
    %136 = vector.broadcast %128 : vector<1x32xf32> to vector<6x32xf32>
    %137 = arith.mulf %135, %136 : vector<6x32xf32>
    %138 = vector.broadcast %132 : vector<1x32xf32> to vector<6x32xf32>
    %139 = arith.addf %137, %138 : vector<6x32xf32>
    %140 = arith.truncf %139 : vector<6x32xf32> to vector<6x32xbf16>
    %c0_77 = arith.constant 0 : index
    %c0_78 = arith.constant 0 : index
    %c0_79 = arith.constant 0 : index
    %141 = vector.load %arg10[%c0_77, %c0_78, %c0_79] : memref<6x6x32xbf16, #tpu.memory_space<vmem>>, vector<1x6x32xbf16>
    %142 = vector.shape_cast %141 : vector<1x6x32xbf16> to vector<6x32xbf16>
    %143 = vector.shape_cast %140 : vector<6x32xbf16> to vector<1x6x32xbf16>
    tpu.vector_store %arg10[%c0_77, %c0_78, %c0_79], %143 {strides = array<i32>} : memref<6x6x32xbf16, #tpu.memory_space<vmem>>, vector<1x6x32xbf16>,
    %c1_80 = arith.constant 1 : index
    %c0_81 = arith.constant 0 : index
    %c0_82 = arith.constant 0 : index
    %144 = vector.load %arg10[%c1_80, %c0_81, %c0_82] : memref<6x6x32xbf16, #tpu.memory_space<vmem>>, vector<1x6x32xbf16>
    %145 = vector.shape_cast %144 : vector<1x6x32xbf16> to vector<6x32xbf16>
    %146 = arith.extf %145 : vector<6x32xbf16> to vector<6x32xf32>
    %147 = vector.broadcast %128 : vector<1x32xf32> to vector<6x32xf32>
    %148 = arith.mulf %146, %147 : vector<6x32xf32>
    %149 = vector.broadcast %132 : vector<1x32xf32> to vector<6x32xf32>
    %150 = arith.addf %148, %149 : vector<6x32xf32>
    %151 = arith.truncf %150 : vector<6x32xf32> to vector<6x32xbf16>
    %c1_83 = arith.constant 1 : index
    %c0_84 = arith.constant 0 : index
    %c0_85 = arith.constant 0 : index
    %152 = vector.load %arg10[%c1_83, %c0_84, %c0_85] : memref<6x6x32xbf16, #tpu.memory_space<vmem>>, vector<1x6x32xbf16>
    %153 = vector.shape_cast %152 : vector<1x6x32xbf16> to vector<6x32xbf16>
    %154 = vector.shape_cast %151 : vector<6x32xbf16> to vector<1x6x32xbf16>
    tpu.vector_store %arg10[%c1_83, %c0_84, %c0_85], %154 {strides = array<i32>} : memref<6x6x32xbf16, #tpu.memory_space<vmem>>, vector<1x6x32xbf16>,
    %c2_86 = arith.constant 2 : index
    %c0_87 = arith.constant 0 : index
    %c0_88 = arith.constant 0 : index
    %155 = vector.load %arg10[%c2_86, %c0_87, %c0_88] : memref<6x6x32xbf16, #tpu.memory_space<vmem>>, vector<1x6x32xbf16>
    %156 = vector.shape_cast %155 : vector<1x6x32xbf16> to vector<6x32xbf16>
    %157 = arith.extf %156 : vector<6x32xbf16> to vector<6x32xf32>
    %158 = vector.broadcast %128 : vector<1x32xf32> to vector<6x32xf32>
    %159 = arith.mulf %157, %158 : vector<6x32xf32>
    %160 = vector.broadcast %132 : vector<1x32xf32> to vector<6x32xf32>
    %161 = arith.addf %159, %160 : vector<6x32xf32>
    %162 = arith.truncf %161 : vector<6x32xf32> to vector<6x32xbf16>
    %c2_89 = arith.constant 2 : index
    %c0_90 = arith.constant 0 : index
    %c0_91 = arith.constant 0 : index
    %163 = vector.load %arg10[%c2_89, %c0_90, %c0_91] : memref<6x6x32xbf16, #tpu.memory_space<vmem>>, vector<1x6x32xbf16>
    %164 = vector.shape_cast %163 : vector<1x6x32xbf16> to vector<6x32xbf16>
    %165 = vector.shape_cast %162 : vector<6x32xbf16> to vector<1x6x32xbf16>
    tpu.vector_store %arg10[%c2_89, %c0_90, %c0_91], %165 {strides = array<i32>} : memref<6x6x32xbf16, #tpu.memory_space<vmem>>, vector<1x6x32xbf16>,
    %c3_92 = arith.constant 3 : index
    %c0_93 = arith.constant 0 : index
    %c0_94 = arith.constant 0 : index
    %166 = vector.load %arg10[%c3_92, %c0_93, %c0_94] : memref<6x6x32xbf16, #tpu.memory_space<vmem>>, vector<1x6x32xbf16>
    %167 = vector.shape_cast %166 : vector<1x6x32xbf16> to vector<6x32xbf16>
    %168 = arith.extf %167 : vector<6x32xbf16> to vector<6x32xf32>
    %169 = vector.broadcast %128 : vector<1x32xf32> to vector<6x32xf32>
    %170 = arith.mulf %168, %169 : vector<6x32xf32>
    %171 = vector.broadcast %132 : vector<1x32xf32> to vector<6x32xf32>
    %172 = arith.addf %170, %171 : vector<6x32xf32>
    %173 = arith.truncf %172 : vector<6x32xf32> to vector<6x32xbf16>
    %c3_95 = arith.constant 3 : index
    %c0_96 = arith.constant 0 : index
    %c0_97 = arith.constant 0 : index
    %174 = vector.load %arg10[%c3_95, %c0_96, %c0_97] : memref<6x6x32xbf16, #tpu.memory_space<vmem>>, vector<1x6x32xbf16>
    %175 = vector.shape_cast %174 : vector<1x6x32xbf16> to vector<6x32xbf16>
    %176 = vector.shape_cast %173 : vector<6x32xbf16> to vector<1x6x32xbf16>
    tpu.vector_store %arg10[%c3_95, %c0_96, %c0_97], %176 {strides = array<i32>} : memref<6x6x32xbf16, #tpu.memory_space<vmem>>, vector<1x6x32xbf16>,
    %c4_98 = arith.constant 4 : index
    %c0_99 = arith.constant 0 : index
    %c0_100 = arith.constant 0 : index
    %177 = vector.load %arg10[%c4_98, %c0_99, %c0_100] : memref<6x6x32xbf16, #tpu.memory_space<vmem>>, vector<1x6x32xbf16>
    %178 = vector.shape_cast %177 : vector<1x6x32xbf16> to vector<6x32xbf16>
    %179 = arith.extf %178 : vector<6x32xbf16> to vector<6x32xf32>
    %180 = vector.broadcast %128 : vector<1x32xf32> to vector<6x32xf32>
    %181 = arith.mulf %179, %180 : vector<6x32xf32>
    %182 = vector.broadcast %132 : vector<1x32xf32> to vector<6x32xf32>
    %183 = arith.addf %181, %182 : vector<6x32xf32>
    %184 = arith.truncf %183 : vector<6x32xf32> to vector<6x32xbf16>
    %c4_101 = arith.constant 4 : index
    %c0_102 = arith.constant 0 : index
    %c0_103 = arith.constant 0 : index
    %185 = vector.load %arg10[%c4_101, %c0_102, %c0_103] : memref<6x6x32xbf16, #tpu.memory_space<vmem>>, vector<1x6x32xbf16>
    %186 = vector.shape_cast %185 : vector<1x6x32xbf16> to vector<6x32xbf16>
    %187 = vector.shape_cast %184 : vector<6x32xbf16> to vector<1x6x32xbf16>
    tpu.vector_store %arg10[%c4_101, %c0_102, %c0_103], %187 {strides = array<i32>} : memref<6x6x32xbf16, #tpu.memory_space<vmem>>, vector<1x6x32xbf16>,
    %c5_104 = arith.constant 5 : index
    %c0_105 = arith.constant 0 : index
    %c0_106 = arith.constant 0 : index
    %188 = vector.load %arg10[%c5_104, %c0_105, %c0_106] : memref<6x6x32xbf16, #tpu.memory_space<vmem>>, vector<1x6x32xbf16>
    %189 = vector.shape_cast %188 : vector<1x6x32xbf16> to vector<6x32xbf16>
    %190 = arith.extf %189 : vector<6x32xbf16> to vector<6x32xf32>
    %191 = vector.broadcast %128 : vector<1x32xf32> to vector<6x32xf32>
    %192 = arith.mulf %190, %191 : vector<6x32xf32>
    %193 = vector.broadcast %132 : vector<1x32xf32> to vector<6x32xf32>
    %194 = arith.addf %192, %193 : vector<6x32xf32>
    %195 = arith.truncf %194 : vector<6x32xf32> to vector<6x32xbf16>
    %c5_107 = arith.constant 5 : index
    %c0_108 = arith.constant 0 : index
    %c0_109 = arith.constant 0 : index
    %196 = vector.load %arg10[%c5_107, %c0_108, %c0_109] : memref<6x6x32xbf16, #tpu.memory_space<vmem>>, vector<1x6x32xbf16>
    %197 = vector.shape_cast %196 : vector<1x6x32xbf16> to vector<6x32xbf16>
    %198 = vector.shape_cast %195 : vector<6x32xbf16> to vector<1x6x32xbf16>
    tpu.vector_store %arg10[%c5_107, %c0_108, %c0_109], %198 {strides = array<i32>} : memref<6x6x32xbf16, #tpu.memory_space<vmem>>, vector<1x6x32xbf16>,
    %c0_110 = arith.constant 0 : index
    %c0_111 = arith.constant 0 : index
    %c0_112 = arith.constant 0 : index
    %199 = vector.load %arg10[%c0_110, %c0_111, %c0_112] : memref<6x6x32xbf16, #tpu.memory_space<vmem>>, vector<1x5x32xbf16>
    %200 = vector.shape_cast %199 : vector<1x5x32xbf16> to vector<5x32xbf16>
    %c0_113 = arith.constant 0 : index
    %c0_114 = arith.constant 0 : index
    %c0_115 = arith.constant 0 : index
    %201 = vector.load %arg5[%c0_113, %c0_114, %c0_115] : memref<7x32x64xbf16, #tpu.memory_space<vmem>>, vector<1x32x64xbf16>
    %202 = vector.shape_cast %201 : vector<1x32x64xbf16> to vector<32x64xbf16>
    %cst_116 = arith.constant dense<0.000000e+00> : vector<5x64xf32>
    %203 = tpu.matmul %200, %202, %cst_116 {dimension_numbers = #tpu.dot_dimension_numbers<[1], [0], [0], [1], [0, 0, 1, 1], [], []>} : vector<5x32xbf16>, vector<32x64xbf16>, vector<5x64xf32> -> vector<5x64xf32>
    %c1_117 = arith.constant 1 : index
    %c0_118 = arith.constant 0 : index
    %c0_119 = arith.constant 0 : index
    %204 = vector.load %arg10[%c1_117, %c0_118, %c0_119] : memref<6x6x32xbf16, #tpu.memory_space<vmem>>, vector<1x5x32xbf16>
    %205 = vector.shape_cast %204 : vector<1x5x32xbf16> to vector<5x32xbf16>
    %c1_120 = arith.constant 1 : index
    %c0_121 = arith.constant 0 : index
    %c0_122 = arith.constant 0 : index
    %206 = vector.load %arg5[%c1_120, %c0_121, %c0_122] : memref<7x32x64xbf16, #tpu.memory_space<vmem>>, vector<1x32x64xbf16>
    %207 = vector.shape_cast %206 : vector<1x32x64xbf16> to vector<32x64xbf16>
    %cst_123 = arith.constant dense<0.000000e+00> : vector<5x64xf32>
    %208 = tpu.matmul %205, %207, %cst_123 {dimension_numbers = #tpu.dot_dimension_numbers<[1], [0], [0], [1], [0, 0, 1, 1], [], []>} : vector<5x32xbf16>, vector<32x64xbf16>, vector<5x64xf32> -> vector<5x64xf32>
    %209 = arith.addf %203, %208 : vector<5x64xf32>
    %c2_124 = arith.constant 2 : index
    %c0_125 = arith.constant 0 : index
    %c0_126 = arith.constant 0 : index
    %210 = vector.load %arg10[%c2_124, %c0_125, %c0_126] : memref<6x6x32xbf16, #tpu.memory_space<vmem>>, vector<1x5x32xbf16>
    %211 = vector.shape_cast %210 : vector<1x5x32xbf16> to vector<5x32xbf16>
    %c2_127 = arith.constant 2 : index
    %c0_128 = arith.constant 0 : index
    %c0_129 = arith.constant 0 : index
    %212 = vector.load %arg5[%c2_127, %c0_128, %c0_129] : memref<7x32x64xbf16, #tpu.memory_space<vmem>>, vector<1x32x64xbf16>
    %213 = vector.shape_cast %212 : vector<1x32x64xbf16> to vector<32x64xbf16>
    %cst_130 = arith.constant dense<0.000000e+00> : vector<5x64xf32>
    %214 = tpu.matmul %211, %213, %cst_130 {dimension_numbers = #tpu.dot_dimension_numbers<[1], [0], [0], [1], [0, 0, 1, 1], [], []>} : vector<5x32xbf16>, vector<32x64xbf16>, vector<5x64xf32> -> vector<5x64xf32>
    %215 = arith.addf %209, %214 : vector<5x64xf32>
    %c3_131 = arith.constant 3 : index
    %c0_132 = arith.constant 0 : index
    %c0_133 = arith.constant 0 : index
    %216 = vector.load %arg10[%c3_131, %c0_132, %c0_133] : memref<6x6x32xbf16, #tpu.memory_space<vmem>>, vector<1x5x32xbf16>
    %217 = vector.shape_cast %216 : vector<1x5x32xbf16> to vector<5x32xbf16>
    %c3_134 = arith.constant 3 : index
    %c0_135 = arith.constant 0 : index
    %c0_136 = arith.constant 0 : index
    %218 = vector.load %arg5[%c3_134, %c0_135, %c0_136] : memref<7x32x64xbf16, #tpu.memory_space<vmem>>, vector<1x32x64xbf16>
    %219 = vector.shape_cast %218 : vector<1x32x64xbf16> to vector<32x64xbf16>
    %cst_137 = arith.constant dense<0.000000e+00> : vector<5x64xf32>
    %220 = tpu.matmul %217, %219, %cst_137 {dimension_numbers = #tpu.dot_dimension_numbers<[1], [0], [0], [1], [0, 0, 1, 1], [], []>} : vector<5x32xbf16>, vector<32x64xbf16>, vector<5x64xf32> -> vector<5x64xf32>
    %221 = arith.addf %215, %220 : vector<5x64xf32>
    %c4_138 = arith.constant 4 : index
    %c0_139 = arith.constant 0 : index
    %c0_140 = arith.constant 0 : index
    %222 = vector.load %arg10[%c4_138, %c0_139, %c0_140] : memref<6x6x32xbf16, #tpu.memory_space<vmem>>, vector<1x5x32xbf16>
    %223 = vector.shape_cast %222 : vector<1x5x32xbf16> to vector<5x32xbf16>
    %c4_141 = arith.constant 4 : index
    %c0_142 = arith.constant 0 : index
    %c0_143 = arith.constant 0 : index
    %224 = vector.load %arg5[%c4_141, %c0_142, %c0_143] : memref<7x32x64xbf16, #tpu.memory_space<vmem>>, vector<1x32x64xbf16>
    %225 = vector.shape_cast %224 : vector<1x32x64xbf16> to vector<32x64xbf16>
    %cst_144 = arith.constant dense<0.000000e+00> : vector<5x64xf32>
    %226 = tpu.matmul %223, %225, %cst_144 {dimension_numbers = #tpu.dot_dimension_numbers<[1], [0], [0], [1], [0, 0, 1, 1], [], []>} : vector<5x32xbf16>, vector<32x64xbf16>, vector<5x64xf32> -> vector<5x64xf32>
    %227 = arith.addf %221, %226 : vector<5x64xf32>
    %c5_145 = arith.constant 5 : index
    %c0_146 = arith.constant 0 : index
    %c0_147 = arith.constant 0 : index
    %228 = vector.load %arg10[%c5_145, %c0_146, %c0_147] : memref<6x6x32xbf16, #tpu.memory_space<vmem>>, vector<1x5x32xbf16>
    %229 = vector.shape_cast %228 : vector<1x5x32xbf16> to vector<5x32xbf16>
    %c5_148 = arith.constant 5 : index
    %c0_149 = arith.constant 0 : index
    %c0_150 = arith.constant 0 : index
    %230 = vector.load %arg5[%c5_148, %c0_149, %c0_150] : memref<7x32x64xbf16, #tpu.memory_space<vmem>>, vector<1x32x64xbf16>
    %231 = vector.shape_cast %230 : vector<1x32x64xbf16> to vector<32x64xbf16>
    %cst_151 = arith.constant dense<0.000000e+00> : vector<5x64xf32>
    %232 = tpu.matmul %229, %231, %cst_151 {dimension_numbers = #tpu.dot_dimension_numbers<[1], [0], [0], [1], [0, 0, 1, 1], [], []>} : vector<5x32xbf16>, vector<32x64xbf16>, vector<5x64xf32> -> vector<5x64xf32>
    %233 = arith.addf %227, %232 : vector<5x64xf32>
    %c0_152 = arith.constant 0 : index
    %c1_153 = arith.constant 1 : index
    %c0_154 = arith.constant 0 : index
    %234 = vector.load %arg10[%c0_152, %c1_153, %c0_154] : memref<6x6x32xbf16, #tpu.memory_space<vmem>>, vector<1x5x32xbf16>
    %235 = vector.shape_cast %234 : vector<1x5x32xbf16> to vector<5x32xbf16>
    %c6 = arith.constant 6 : index
    %c0_155 = arith.constant 0 : index
    %c0_156 = arith.constant 0 : index
    %236 = vector.load %arg5[%c6, %c0_155, %c0_156] : memref<7x32x64xbf16, #tpu.memory_space<vmem>>, vector<1x32x64xbf16>
    %237 = vector.shape_cast %236 : vector<1x32x64xbf16> to vector<32x64xbf16>
    %cst_157 = arith.constant dense<0.000000e+00> : vector<5x64xf32>
    %238 = tpu.matmul %235, %237, %cst_157 {dimension_numbers = #tpu.dot_dimension_numbers<[1], [0], [0], [1], [0, 0, 1, 1], [], []>} : vector<5x32xbf16>, vector<32x64xbf16>, vector<5x64xf32> -> vector<5x64xf32>
    %239 = arith.addf %233, %238 : vector<5x64xf32>
    %c0_158 = arith.constant 0 : index
    %c0_159 = arith.constant 0 : index
    %240 = vector.load %arg6[%c0_158, %c0_159] : memref<1x64xf32, #tpu.memory_space<vmem>>, vector<1x64xf32>
    %241 = vector.broadcast %240 : vector<1x64xf32> to vector<5x64xf32>
    %242 = arith.addf %239, %241 : vector<5x64xf32>
    %cst_160 = arith.constant 5.000000e-01 : f32
    %243 = vector.broadcast %cst_160 : f32 to vector<5x64xf32>
    %244 = arith.mulf %243, %242 : vector<5x64xf32>
    %cst_161 = arith.constant 0.707106769 : f32
    %245 = vector.broadcast %cst_161 : f32 to vector<5x64xf32>
    %246 = arith.mulf %242, %245 : vector<5x64xf32>
    %247 = math.erf %246 : vector<5x64xf32>
    %cst_162 = arith.constant 1.000000e+00 : f32
    %248 = vector.broadcast %cst_162 : f32 to vector<5x64xf32>
    %249 = arith.addf %248, %247 : vector<5x64xf32>
    %250 = arith.mulf %244, %249 : vector<5x64xf32>
    %251 = arith.truncf %250 : vector<5x64xf32> to vector<5x64xbf16>
    %c3_163 = arith.constant 3 : index
    %c0_164 = arith.constant 0 : index
    %c0_165 = arith.constant 0 : index
    %252 = vector.load %arg10[%c3_163, %c0_164, %c0_165] : memref<6x6x32xbf16, #tpu.memory_space<vmem>>, vector<1x4x32xbf16>
    %253 = vector.shape_cast %252 : vector<1x4x32xbf16> to vector<4x32xbf16>
    %c0_166 = arith.constant 0 : index
    %c0_167 = arith.constant 0 : index
    %c0_168 = arith.constant 0 : index
    %254 = vector.load %arg5[%c0_166, %c0_167, %c0_168] : memref<7x32x64xbf16, #tpu.memory_space<vmem>>, vector<1x32x64xbf16>
    %255 = vector.shape_cast %254 : vector<1x32x64xbf16> to vector<32x64xbf16>
    %cst_169 = arith.constant dense<0.000000e+00> : vector<4x64xf32>
    %256 = tpu.matmul %253, %255, %cst_169 {dimension_numbers = #tpu.dot_dimension_numbers<[1], [0], [0], [1], [0, 0, 1, 1], [], []>} : vector<4x32xbf16>, vector<32x64xbf16>, vector<4x64xf32> -> vector<4x64xf32>
    %c4_170 = arith.constant 4 : index
    %c0_171 = arith.constant 0 : index
    %c0_172 = arith.constant 0 : index
    %257 = vector.load %arg10[%c4_170, %c0_171, %c0_172] : memref<6x6x32xbf16, #tpu.memory_space<vmem>>, vector<1x4x32xbf16>
    %258 = vector.shape_cast %257 : vector<1x4x32xbf16> to vector<4x32xbf16>
    %c1_173 = arith.constant 1 : index
    %c0_174 = arith.constant 0 : index
    %c0_175 = arith.constant 0 : index
    %259 = vector.load %arg5[%c1_173, %c0_174, %c0_175] : memref<7x32x64xbf16, #tpu.memory_space<vmem>>, vector<1x32x64xbf16>
    %260 = vector.shape_cast %259 : vector<1x32x64xbf16> to vector<32x64xbf16>
    %cst_176 = arith.constant dense<0.000000e+00> : vector<4x64xf32>
    %261 = tpu.matmul %258, %260, %cst_176 {dimension_numbers = #tpu.dot_dimension_numbers<[1], [0], [0], [1], [0, 0, 1, 1], [], []>} : vector<4x32xbf16>, vector<32x64xbf16>, vector<4x64xf32> -> vector<4x64xf32>
    %262 = arith.addf %256, %261 : vector<4x64xf32>
    %c5_177 = arith.constant 5 : index
    %c0_178 = arith.constant 0 : index
    %c0_179 = arith.constant 0 : index
    %263 = vector.load %arg10[%c5_177, %c0_178, %c0_179] : memref<6x6x32xbf16, #tpu.memory_space<vmem>>, vector<1x4x32xbf16>
    %264 = vector.shape_cast %263 : vector<1x4x32xbf16> to vector<4x32xbf16>
    %c2_180 = arith.constant 2 : index
    %c0_181 = arith.constant 0 : index
    %c0_182 = arith.constant 0 : index
    %265 = vector.load %arg5[%c2_180, %c0_181, %c0_182] : memref<7x32x64xbf16, #tpu.memory_space<vmem>>, vector<1x32x64xbf16>
    %266 = vector.shape_cast %265 : vector<1x32x64xbf16> to vector<32x64xbf16>
    %cst_183 = arith.constant dense<0.000000e+00> : vector<4x64xf32>
    %267 = tpu.matmul %264, %266, %cst_183 {dimension_numbers = #tpu.dot_dimension_numbers<[1], [0], [0], [1], [0, 0, 1, 1], [], []>} : vector<4x32xbf16>, vector<32x64xbf16>, vector<4x64xf32> -> vector<4x64xf32>
    %268 = arith.addf %262, %267 : vector<4x64xf32>
    %c0_184 = arith.constant 0 : index
    %c1_185 = arith.constant 1 : index
    %c0_186 = arith.constant 0 : index
    %269 = vector.load %arg10[%c0_184, %c1_185, %c0_186] : memref<6x6x32xbf16, #tpu.memory_space<vmem>>, vector<1x4x32xbf16>
    %270 = vector.shape_cast %269 : vector<1x4x32xbf16> to vector<4x32xbf16>
    %c3_187 = arith.constant 3 : index
    %c0_188 = arith.constant 0 : index
    %c0_189 = arith.constant 0 : index
    %271 = vector.load %arg5[%c3_187, %c0_188, %c0_189] : memref<7x32x64xbf16, #tpu.memory_space<vmem>>, vector<1x32x64xbf16>
    %272 = vector.shape_cast %271 : vector<1x32x64xbf16> to vector<32x64xbf16>
    %cst_190 = arith.constant dense<0.000000e+00> : vector<4x64xf32>
    %273 = tpu.matmul %270, %272, %cst_190 {dimension_numbers = #tpu.dot_dimension_numbers<[1], [0], [0], [1], [0, 0, 1, 1], [], []>} : vector<4x32xbf16>, vector<32x64xbf16>, vector<4x64xf32> -> vector<4x64xf32>
    %274 = arith.addf %268, %273 : vector<4x64xf32>
    %c1_191 = arith.constant 1 : index
    %c1_192 = arith.constant 1 : index
    %c0_193 = arith.constant 0 : index
    %275 = vector.load %arg10[%c1_191, %c1_192, %c0_193] : memref<6x6x32xbf16, #tpu.memory_space<vmem>>, vector<1x4x32xbf16>
    %276 = vector.shape_cast %275 : vector<1x4x32xbf16> to vector<4x32xbf16>
    %c4_194 = arith.constant 4 : index
    %c0_195 = arith.constant 0 : index
    %c0_196 = arith.constant 0 : index
    %277 = vector.load %arg5[%c4_194, %c0_195, %c0_196] : memref<7x32x64xbf16, #tpu.memory_space<vmem>>, vector<1x32x64xbf16>
    %278 = vector.shape_cast %277 : vector<1x32x64xbf16> to vector<32x64xbf16>
    %cst_197 = arith.constant dense<0.000000e+00> : vector<4x64xf32>
    %279 = tpu.matmul %276, %278, %cst_197 {dimension_numbers = #tpu.dot_dimension_numbers<[1], [0], [0], [1], [0, 0, 1, 1], [], []>} : vector<4x32xbf16>, vector<32x64xbf16>, vector<4x64xf32> -> vector<4x64xf32>
    %280 = arith.addf %274, %279 : vector<4x64xf32>
    %c2_198 = arith.constant 2 : index
    %c1_199 = arith.constant 1 : index
    %c0_200 = arith.constant 0 : index
    %281 = vector.load %arg10[%c2_198, %c1_199, %c0_200] : memref<6x6x32xbf16, #tpu.memory_space<vmem>>, vector<1x4x32xbf16>
    %282 = vector.shape_cast %281 : vector<1x4x32xbf16> to vector<4x32xbf16>
    %c5_201 = arith.constant 5 : index
    %c0_202 = arith.constant 0 : index
    %c0_203 = arith.constant 0 : index
    %283 = vector.load %arg5[%c5_201, %c0_202, %c0_203] : memref<7x32x64xbf16, #tpu.memory_space<vmem>>, vector<1x32x64xbf16>
    %284 = vector.shape_cast %283 : vector<1x32x64xbf16> to vector<32x64xbf16>
    %cst_204 = arith.constant dense<0.000000e+00> : vector<4x64xf32>
    %285 = tpu.matmul %282, %284, %cst_204 {dimension_numbers = #tpu.dot_dimension_numbers<[1], [0], [0], [1], [0, 0, 1, 1], [], []>} : vector<4x32xbf16>, vector<32x64xbf16>, vector<4x64xf32> -> vector<4x64xf32>
    %286 = arith.addf %280, %285 : vector<4x64xf32>
    %c3_205 = arith.constant 3 : index
    %c1_206 = arith.constant 1 : index
    %c0_207 = arith.constant 0 : index
    %287 = vector.load %arg10[%c3_205, %c1_206, %c0_207] : memref<6x6x32xbf16, #tpu.memory_space<vmem>>, vector<1x4x32xbf16>
    %288 = vector.shape_cast %287 : vector<1x4x32xbf16> to vector<4x32xbf16>
    %c6_208 = arith.constant 6 : index
    %c0_209 = arith.constant 0 : index
    %c0_210 = arith.constant 0 : index
    %289 = vector.load %arg5[%c6_208, %c0_209, %c0_210] : memref<7x32x64xbf16, #tpu.memory_space<vmem>>, vector<1x32x64xbf16>
    %290 = vector.shape_cast %289 : vector<1x32x64xbf16> to vector<32x64xbf16>
    %cst_211 = arith.constant dense<0.000000e+00> : vector<4x64xf32>
    %291 = tpu.matmul %288, %290, %cst_211 {dimension_numbers = #tpu.dot_dimension_numbers<[1], [0], [0], [1], [0, 0, 1, 1], [], []>} : vector<4x32xbf16>, vector<32x64xbf16>, vector<4x64xf32> -> vector<4x64xf32>
    %292 = arith.addf %286, %291 : vector<4x64xf32>
    %c0_212 = arith.constant 0 : index
    %c0_213 = arith.constant 0 : index
    %293 = vector.load %arg6[%c0_212, %c0_213] : memref<1x64xf32, #tpu.memory_space<vmem>>, vector<1x64xf32>
    %294 = vector.broadcast %293 : vector<1x64xf32> to vector<4x64xf32>
    %295 = arith.addf %292, %294 : vector<4x64xf32>
    %cst_214 = arith.constant 5.000000e-01 : f32
    %296 = vector.broadcast %cst_214 : f32 to vector<4x64xf32>
    %297 = arith.mulf %296, %295 : vector<4x64xf32>
    %cst_215 = arith.constant 0.707106769 : f32
    %298 = vector.broadcast %cst_215 : f32 to vector<4x64xf32>
    %299 = arith.mulf %295, %298 : vector<4x64xf32>
    %300 = math.erf %299 : vector<4x64xf32>
    %cst_216 = arith.constant 1.000000e+00 : f32
    %301 = vector.broadcast %cst_216 : f32 to vector<4x64xf32>
    %302 = arith.addf %301, %300 : vector<4x64xf32>
    %303 = arith.mulf %297, %302 : vector<4x64xf32>
    %304 = arith.truncf %303 : vector<4x64xf32> to vector<4x64xbf16>
    %305 = vector.extract_strided_slice %251 {offsets = [0, 0], sizes = [4, 64], strides = [1, 1]} : vector<5x64xbf16> to vector<4x64xbf16>
    %c0_217 = arith.constant 0 : index
    %c0_218 = arith.constant 0 : index
    %c0_219 = arith.constant 0 : index
    %306 = vector.load %arg7[%c0_217, %c0_218, %c0_219] : memref<3x64x32xbf16, #tpu.memory_space<vmem>>, vector<1x64x32xbf16>
    %307 = vector.shape_cast %306 : vector<1x64x32xbf16> to vector<64x32xbf16>
    %cst_220 = arith.constant dense<0.000000e+00> : vector<4x32xf32>
    %308 = tpu.matmul %305, %307, %cst_220 {dimension_numbers = #tpu.dot_dimension_numbers<[1], [0], [0], [1], [0, 0, 1, 1], [], []>} : vector<4x64xbf16>, vector<64x32xbf16>, vector<4x32xf32> -> vector<4x32xf32>
    %c1_221 = arith.constant 1 : index
    %c0_222 = arith.constant 0 : index
    %c0_223 = arith.constant 0 : index
    %309 = vector.load %arg7[%c1_221, %c0_222, %c0_223] : memref<3x64x32xbf16, #tpu.memory_space<vmem>>, vector<1x64x32xbf16>
    %310 = vector.shape_cast %309 : vector<1x64x32xbf16> to vector<64x32xbf16>
    %cst_224 = arith.constant dense<0.000000e+00> : vector<4x32xf32>
    %311 = tpu.matmul %304, %310, %cst_224 {dimension_numbers = #tpu.dot_dimension_numbers<[1], [0], [0], [1], [0, 0, 1, 1], [], []>} : vector<4x64xbf16>, vector<64x32xbf16>, vector<4x32xf32> -> vector<4x32xf32>
    %312 = arith.addf %308, %311 : vector<4x32xf32>
    %313 = vector.extract_strided_slice %251 {offsets = [1, 0], sizes = [4, 64], strides = [1, 1]} : vector<5x64xbf16> to vector<4x64xbf16>
    %c2_225 = arith.constant 2 : index
    %c0_226 = arith.constant 0 : index
    %c0_227 = arith.constant 0 : index
    %314 = vector.load %arg7[%c2_225, %c0_226, %c0_227] : memref<3x64x32xbf16, #tpu.memory_space<vmem>>, vector<1x64x32xbf16>
    %315 = vector.shape_cast %314 : vector<1x64x32xbf16> to vector<64x32xbf16>
    %cst_228 = arith.constant dense<0.000000e+00> : vector<4x32xf32>
    %316 = tpu.matmul %313, %315, %cst_228 {dimension_numbers = #tpu.dot_dimension_numbers<[1], [0], [0], [1], [0, 0, 1, 1], [], []>} : vector<4x64xbf16>, vector<64x32xbf16>, vector<4x32xf32> -> vector<4x32xf32>
    %317 = arith.addf %312, %316 : vector<4x32xf32>
    %c0_229 = arith.constant 0 : index
    %c0_230 = arith.constant 0 : index
    %318 = vector.load %arg8[%c0_229, %c0_230] : memref<1x32xf32, #tpu.memory_space<vmem>>, vector<1x32xf32>
    %319 = vector.broadcast %318 : vector<1x32xf32> to vector<4x32xf32>
    %320 = arith.addf %317, %319 : vector<4x32xf32>
    %cst_231 = arith.constant 5.000000e-01 : f32
    %321 = vector.broadcast %cst_231 : f32 to vector<4x32xf32>
    %322 = arith.mulf %321, %320 : vector<4x32xf32>
    %cst_232 = arith.constant 0.707106769 : f32
    %323 = vector.broadcast %cst_232 : f32 to vector<4x32xf32>
    %324 = arith.mulf %320, %323 : vector<4x32xf32>
    %325 = math.erf %324 : vector<4x32xf32>
    %cst_233 = arith.constant 1.000000e+00 : f32
    %326 = vector.broadcast %cst_233 : f32 to vector<4x32xf32>
    %327 = arith.addf %326, %325 : vector<4x32xf32>
    %328 = arith.mulf %322, %327 : vector<4x32xf32>
    %c0_234 = arith.constant 0 : index
    %c0_235 = arith.constant 0 : index
    %c0_236 = arith.constant 0 : index
    %329 = vector.load %arg9[%c0_234, %c0_235, %c0_236] : memref<1x4x32xf32, #tpu.memory_space<vmem>>, vector<1x4x32xf32>
    %330 = vector.shape_cast %329 : vector<1x4x32xf32> to vector<4x32xf32>
    %331 = vector.shape_cast %328 : vector<4x32xf32> to vector<1x4x32xf32>
    tpu.vector_store %arg9[%c0_234, %c0_235, %c0_236], %331 {strides = array<i32>} : memref<1x4x32xf32, #tpu.memory_space<vmem>>, vector<1x4x32xf32>,
    return
  }
  func.func @transform_0(%arg0: i32) -> (i32, i32, i32, i32) {
    %c0_i32 = arith.constant 0 : i32
    %c0_i32_0 = arith.constant 0 : i32
    %c0_i32_1 = arith.constant 0 : i32
    %c0_i32_2 = arith.constant 0 : i32
    return %arg0, %c0_i32, %c0_i32_0, %c0_i32_1 : i32, i32, i32, i32
  }
  func.func @transform_1(%arg0: i32) -> (i32, i32) {
    %c0_i32 = arith.constant 0 : i32
    %c0_i32_0 = arith.constant 0 : i32
    %c0_i32_1 = arith.constant 0 : i32
    return %c0_i32, %c0_i32_0 : i32, i32
  }
  func.func @transform_2(%arg0: i32) -> (i32, i32) {
    %c0_i32 = arith.constant 0 : i32
    %c0_i32_0 = arith.constant 0 : i32
    %c0_i32_1 = arith.constant 0 : i32
    return %c0_i32, %c0_i32_0 : i32, i32
  }
  func.func @transform_3(%arg0: i32) -> (i32, i32) {
    %c0_i32 = arith.constant 0 : i32
    %c0_i32_0 = arith.constant 0 : i32
    %c0_i32_1 = arith.constant 0 : i32
    return %c0_i32, %c0_i32_0 : i32, i32
  }
  func.func @transform_4(%arg0: i32) -> (i32, i32, i32) {
    %c0_i32 = arith.constant 0 : i32
    %c0_i32_0 = arith.constant 0 : i32
    %c0_i32_1 = arith.constant 0 : i32
    %c0_i32_2 = arith.constant 0 : i32
    return %c0_i32, %c0_i32_0, %c0_i32_1 : i32, i32, i32
  }
  func.func @transform_5(%arg0: i32) -> (i32, i32) {
    %c0_i32 = arith.constant 0 : i32
    %c0_i32_0 = arith.constant 0 : i32
    %c0_i32_1 = arith.constant 0 : i32
    return %c0_i32, %c0_i32_0 : i32, i32
  }
  func.func @transform_6(%arg0: i32) -> (i32, i32, i32) {
    %c0_i32 = arith.constant 0 : i32
    %c0_i32_0 = arith.constant 0 : i32
    %c0_i32_1 = arith.constant 0 : i32
    %c0_i32_2 = arith.constant 0 : i32
    return %c0_i32, %c0_i32_0, %c0_i32_1 : i32, i32, i32
  }
  func.func @transform_7(%arg0: i32) -> (i32, i32) {
    %c0_i32 = arith.constant 0 : i32
    %c0_i32_0 = arith.constant 0 : i32
    %c0_i32_1 = arith.constant 0 : i32
    return %c0_i32, %c0_i32_0 : i32, i32
  }
  func.func @transform_8(%arg0: i32) -> (i32, i32, i32) {
    %c0_i32 = arith.constant 0 : i32
    %c0_i32_0 = arith.constant 0 : i32
    %c0_i32_1 = arith.constant 0 : i32
    return %arg0, %c0_i32, %c0_i32_0 : i32, i32, i32
  }
}

</mosaic_0001>

<llo_original>
// kernel: tpu_custom_call.1
$region0: #{tpu_custom_call.1}
  #allocation0 [shape = 'u32[]', space=smem, size = 0x4, offset = 0x4, fixed_abs, tag = 'smem constant byte address 0x4 - core index']
  #allocation1 [shape = 'u32[72,128]{1,0:T(1,128)}', space=vmem, size = 0x9000, scoped, tag = 'internal scratch']
  #allocation2 [shape = 'bf16[6,6,32]{2,1,0:T(8,128)(2,1)}', space=vmem, size = 0x3000, scoped, tag = 'scratch operand']
  %s0 = inlined_call_operand.vmem [shape: bf16[2,6,6,128], index: 0, kind: input, shape index: {}]
  %s1 = inlined_call_operand.vmem [shape: bf16[128,32], index: 1, kind: input, shape index: {}]
  %s2 = inlined_call_operand.vmem [shape: f32[1,32], index: 2, kind: input, shape index: {}]
  %s3 = inlined_call_operand.vmem [shape: f32[1,32], index: 3, kind: input, shape index: {}]
  %s4 = inlined_call_operand.vmem [shape: bf16[7,32,64], index: 4, kind: input, shape index: {}]
  %s5 = inlined_call_operand.vmem [shape: f32[1,64], index: 5, kind: input, shape index: {}]
  %s6 = inlined_call_operand.vmem [shape: bf16[3,64,32], index: 6, kind: input, shape index: {}]
  %s7 = inlined_call_operand.vmem [shape: f32[1,32], index: 7, kind: input, shape index: {}]
  %s8 = inlined_call_operand.hbm [shape: f32[2,4,32], index: 8, kind: output, shape index: {}]
  %s9 = sld [smem:[#allocation0]]
  $region65: #{tpu_custom_call.1} parent=0
    _
  %s11 = ssub.s32 1, %s9
  %s12 = scalar_select 0, %s11, %s9
  $region1: #{tpu_custom_call.1} parent=0
    #allocation3 [shape = 'u8[4096]{0}', space=vmem, size = 0x1000, scoped, tag = 'output window, operand 0']
    #allocation4 [shape = 's32[2]{0}', space=sflag, size = 0x8, scoped, tag = 'scoped memory for tpu_custom_call.1']
    %13 = vsyncpa [#allocation4], 0
    %s14 = scalar_lea.sflag [#allocation4], 1
    %15 = vsyncpa %s14, 0
    loop: start=0, step=1, limit=4
    $region2: #{tpu_custom_call.1} parent=1 // loop_pre_header
      _
    $region3: #{tpu_custom_call.1} parent=1 // loop_header
      %s17 = sphi 0, %s21
      %p18 = scmp.ge.s32.totalorder %s17, 4
      %s27 = sphi 0, %s29
      %s30 = sphi 0, %s27
      %s31 = sphi 0, %s30
      %s47 = sphi 0, %s31
      %s51 = sphi 0, %s51
      %s53 = sphi 0, %s51
      %s54 = sphi 0, %s53
      %s68 = sphi 0, %s54
      %s72 = sphi 0, %s72
      %s74 = sphi 0, %s72
      %s75 = sphi 0, %s74
      %s89 = sphi 0, %s75
      %s93 = sphi 0, %s93
      %s95 = sphi 0, %s93
      %s96 = sphi 0, %s95
      %s110 = sphi 0, %s96
      %s114 = sphi 0, %s114
      %s116 = sphi 0, %s114
      %s117 = sphi 0, %s116
      %s131 = sphi 0, %s117
      %s135 = sphi 0, %s135
      %s137 = sphi 0, %s135
      %s138 = sphi 0, %s137
      %s152 = sphi 0, %s138
      %s156 = sphi 0, %s156
      %s158 = sphi 0, %s156
      %s159 = sphi 0, %s158
      %s173 = sphi 0, %s159
      %s177 = sphi 0, %s177
      %s179 = sphi 0, %s177
      %s180 = sphi 0, %s179
      %s194 = sphi 0, %s180
      %s200 = sphi 0, %s202
      %s203 = sphi 0, %s200
      %s204 = sphi 0, %s203
      %s220 = sphi 0, %s204
    $region4: #{tpu_custom_call.1} parent=1 // loop_header_branch
      %20 = sbr.rel (%p18) target = $region8
    $region5: #{tpu_custom_call.1} parent=1 // loop_body
      %s22 = ssub.s32 %s17, 1
      %s23 = ssub.s32 %s17, 2
      %s24 = sadd.s32 %s17, 1
      %s25 = ssub.s32 %s17, %s24
      %p26 = scmp.eq.s32.totalorder %s25, 0
      %s28 = sadd.s32 %s27, 1
      %s29 = scalar_select %p26, %s27, %s28
      %p32 = pneg %p26
      %p33 = scmp.eq.s32.totalorder %s17, 1
      %p34 = por %p32, %p33
      %p35 = scmp.ne.s32.totalorder %s27, %s30
      %p36 = scmp.eq.s32.totalorder %s17, 0
      %p37 = por %p35, %p36
      %p38 = scmp.ne.s32.totalorder %s27, %s30
      %p39 = scmp.eq.s32.totalorder %s22, 1
      %p40 = por %p38, %p39
      %p41 = scmp.ne.s32.totalorder %s30, %s31
      %p42 = scmp.eq.s32.totalorder %s22, 0
      %p43 = por %p41, %p42
      %p44 = scmp.ne.s32.totalorder %s30, %s31
      %p45 = scmp.eq.s32.totalorder %s23, 1
      %p46 = por %p44, %p45
      %p48 = scmp.ne.s32.totalorder %s31, %s47
      %p49 = scmp.eq.s32.totalorder %s23, 0
      %p50 = por %p48, %p49
      %s52 = sadd.s32 %s51, 1
      %p55 = scmp.eq.s32.totalorder %s17, 1
      %p56 = scmp.ne.s32.totalorder %s51, %s53
      %p57 = scmp.eq.s32.totalorder %s17, 0
      %p58 = por %p56, %p57
      %p59 = scmp.ne.s32.totalorder %s51, %s53
      %p60 = scmp.eq.s32.totalorder %s22, 1
      %p61 = por %p59, %p60
      %p62 = scmp.ne.s32.totalorder %s53, %s54
      %p63 = scmp.eq.s32.totalorder %s22, 0
      %p64 = por %p62, %p63
      %p65 = scmp.ne.s32.totalorder %s53, %s54
      %p66 = scmp.eq.s32.totalorder %s23, 1
      %p67 = por %p65, %p66
      %p69 = scmp.ne.s32.totalorder %s54, %s68
      %p70 = scmp.eq.s32.totalorder %s23, 0
      %p71 = por %p69, %p70
      %s73 = sadd.s32 %s72, 1
      %p76 = scmp.eq.s32.totalorder %s17, 1
      %p77 = scmp.ne.s32.totalorder %s72, %s74
      %p78 = scmp.eq.s32.totalorder %s17, 0
      %p79 = por %p77, %p78
      %p80 = scmp.ne.s32.totalorder %s72, %s74
      %p81 = scmp.eq.s32.totalorder %s22, 1
      %p82 = por %p80, %p81
      %p83 = scmp.ne.s32.totalorder %s74, %s75
      %p84 = scmp.eq.s32.totalorder %s22, 0
      %p85 = por %p83, %p84
      %p86 = scmp.ne.s32.totalorder %s74, %s75
      %p87 = scmp.eq.s32.totalorder %s23, 1
      %p88 = por %p86, %p87
      %p90 = scmp.ne.s32.totalorder %s75, %s89
      %p91 = scmp.eq.s32.totalorder %s23, 0
      %p92 = por %p90, %p91
      %s94 = sadd.s32 %s93, 1
      %p97 = scmp.eq.s32.totalorder %s17, 1
      %p98 = scmp.ne.s32.totalorder %s93, %s95
      %p99 = scmp.eq.s32.totalorder %s17, 0
      %p100 = por %p98, %p99
      %p101 = scmp.ne.s32.totalorder %s93, %s95
      %p102 = scmp.eq.s32.totalorder %s22, 1
      %p103 = por %p101, %p102
      %p104 = scmp.ne.s32.totalorder %s95, %s96
      %p105 = scmp.eq.s32.totalorder %s22, 0
      %p106 = por %p104, %p105
      %p107 = scmp.ne.s32.totalorder %s95, %s96
      %p108 = scmp.eq.s32.totalorder %s23, 1
      %p109 = por %p107, %p108
      %p111 = scmp.ne.s32.totalorder %s96, %s110
      %p112 = scmp.eq.s32.totalorder %s23, 0
      %p113 = por %p111, %p112
      %s115 = sadd.s32 %s114, 1
      %p118 = scmp.eq.s32.totalorder %s17, 1
      %p119 = scmp.ne.s32.totalorder %s114, %s116
      %p120 = scmp.eq.s32.totalorder %s17, 0
      %p121 = por %p119, %p120
      %p122 = scmp.ne.s32.totalorder %s114, %s116
      %p123 = scmp.eq.s32.totalorder %s22, 1
      %p124 = por %p122, %p123
      %p125 = scmp.ne.s32.totalorder %s116, %s117
      %p126 = scmp.eq.s32.totalorder %s22, 0
      %p127 = por %p125, %p126
      %p128 = scmp.ne.s32.totalorder %s116, %s117
      %p129 = scmp.eq.s32.totalorder %s23, 1
      %p130 = por %p128, %p129
      %p132 = scmp.ne.s32.totalorder %s117, %s131
      %p133 = scmp.eq.s32.totalorder %s23, 0
      %p134 = por %p132, %p133
      %s136 = sadd.s32 %s135, 1
      %p139 = scmp.eq.s32.totalorder %s17, 1
      %p140 = scmp.ne.s32.totalorder %s135, %s137
      %p141 = scmp.eq.s32.totalorder %s17, 0
      %p142 = por %p140, %p141
      %p143 = scmp.ne.s32.totalorder %s135, %s137
      %p144 = scmp.eq.s32.totalorder %s22, 1
      %p145 = por %p143, %p144
      %p146 = scmp.ne.s32.totalorder %s137, %s138
      %p147 = scmp.eq.s32.totalorder %s22, 0
      %p148 = por %p146, %p147
      %p149 = scmp.ne.s32.totalorder %s137, %s138
      %p150 = scmp.eq.s32.totalorder %s23, 1
      %p151 = por %p149, %p150
      %p153 = scmp.ne.s32.totalorder %s138, %s152
      %p154 = scmp.eq.s32.totalorder %s23, 0
      %p155 = por %p153, %p154
      %s157 = sadd.s32 %s156, 1
      %p160 = scmp.eq.s32.totalorder %s17, 1
      %p161 = scmp.ne.s32.totalorder %s156, %s158
      %p162 = scmp.eq.s32.totalorder %s17, 0
      %p163 = por %p161, %p162
      %p164 = scmp.ne.s32.totalorder %s156, %s158
      %p165 = scmp.eq.s32.totalorder %s22, 1
      %p166 = por %p164, %p165
      %p167 = scmp.ne.s32.totalorder %s158, %s159
      %p168 = scmp.eq.s32.totalorder %s22, 0
      %p169 = por %p167, %p168
      %p170 = scmp.ne.s32.totalorder %s158, %s159
      %p171 = scmp.eq.s32.totalorder %s23, 1
      %p172 = por %p170, %p171
      %p174 = scmp.ne.s32.totalorder %s159, %s173
      %p175 = scmp.eq.s32.totalorder %s23, 0
      %p176 = por %p174, %p175
      %s178 = sadd.s32 %s177, 1
      %p181 = scmp.eq.s32.totalorder %s17, 1
      %p182 = scmp.ne.s32.totalorder %s177, %s179
      %p183 = scmp.eq.s32.totalorder %s17, 0
      %p184 = por %p182, %p183
      %p185 = scmp.ne.s32.totalorder %s177, %s179
      %p186 = scmp.eq.s32.totalorder %s22, 1
      %p187 = por %p185, %p186
      %p188 = scmp.ne.s32.totalorder %s179, %s180
      %p189 = scmp.eq.s32.totalorder %s22, 0
      %p190 = por %p188, %p189
      %p191 = scmp.ne.s32.totalorder %s179, %s180
      %p192 = scmp.eq.s32.totalorder %s23, 1
      %p193 = por %p191, %p192
      %p195 = scmp.ne.s32.totalorder %s180, %s194
      %p196 = scmp.eq.s32.totalorder %s23, 0
      %p197 = por %p195, %p196
      %s198 = ssub.s32 %s17, %s24
      %p199 = scmp.eq.s32.totalorder %s198, 0
      %s201 = sadd.s32 %s200, 1
      %s202 = scalar_select %p199, %s200, %s201
      %p205 = pneg %p199
      %p206 = scmp.eq.s32.totalorder %s17, 1
      %p207 = por %p205, %p206
      %p208 = scmp.ne.s32.totalorder %s200, %s203
      %p209 = scmp.eq.s32.totalorder %s17, 0
      %p210 = por %p208, %p209
      %p211 = scmp.ne.s32.totalorder %s200, %s203
      %p212 = scmp.eq.s32.totalorder %s22, 1
      %p213 = por %p211, %p212
      %p214 = scmp.ne.s32.totalorder %s203, %s204
      %p215 = scmp.eq.s32.totalorder %s22, 0
      %p216 = por %p214, %p215
      %p217 = scmp.ne.s32.totalorder %s203, %s204
      %p218 = scmp.eq.s32.totalorder %s23, 1
      %p219 = por %p217, %p218
      %p221 = scmp.ne.s32.totalorder %s204, %s220
      %p222 = scmp.eq.s32.totalorder %s23, 0
      %p223 = por %p221, %p222
      %p224 = scmp.le.s32.totalorder 1, %s17
      %p225 = scmp.lt.s32.totalorder %s17, 3
      %p226 = pnand %p224, %p225
      %p227 = pneg %p226
      // Predicated region
      $region9: #{tpu_custom_call.1} parent=5 // pred_check
        _
      $region10: #{tpu_custom_call.1} parent=5 // pred_check_branch
        %229 = sbr.rel (%p226) target = $region12
      $region11: #{tpu_custom_call.1} parent=5 // pred_region
        %s230 = ssub.s32 %s17, 1
        // Predicated region
        $region13: #{tpu_custom_call.1} parent=11 // pred_check
          %p231 = pneg %p64
        $region14: #{tpu_custom_call.1} parent=11 // pred_check_branch
          %233 = sbr.rel (%p231) target = $region16
        $region15: #{tpu_custom_call.1} parent=11 // pred_region
          _
        $region16: #{tpu_custom_call.1} parent=11 // pred_fallthru
          _
        // Predicated region
        $region17: #{tpu_custom_call.1} parent=11 // pred_check
          %p234 = pneg %p85
        $region18: #{tpu_custom_call.1} parent=11 // pred_check_branch
          %236 = sbr.rel (%p234) target = $region20
        $region19: #{tpu_custom_call.1} parent=11 // pred_region
          _
        $region20: #{tpu_custom_call.1} parent=11 // pred_fallthru
          _
        // Predicated region
        $region21: #{tpu_custom_call.1} parent=11 // pred_check
          %p237 = pneg %p106
        $region22: #{tpu_custom_call.1} parent=11 // pred_check_branch
          %239 = sbr.rel (%p237) target = $region24
        $region23: #{tpu_custom_call.1} parent=11 // pred_region
          _
        $region24: #{tpu_custom_call.1} parent=11 // pred_fallthru
          _
        // Predicated region
        $region25: #{tpu_custom_call.1} parent=11 // pred_check
          %p240 = pneg %p127
        $region26: #{tpu_custom_call.1} parent=11 // pred_check_branch
          %242 = sbr.rel (%p240) target = $region28
        $region27: #{tpu_custom_call.1} parent=11 // pred_region
          _
        $region28: #{tpu_custom_call.1} parent=11 // pred_fallthru
          _
        // Predicated region
        $region29: #{tpu_custom_call.1} parent=11 // pred_check
          %p243 = pneg %p148
        $region30: #{tpu_custom_call.1} parent=11 // pred_check_branch
          %245 = sbr.rel (%p243) target = $region32
        $region31: #{tpu_custom_call.1} parent=11 // pred_region
          _
        $region32: #{tpu_custom_call.1} parent=11 // pred_fallthru
          _
        // Predicated region
        $region33: #{tpu_custom_call.1} parent=11 // pred_check
          %p246 = pneg %p169
        $region34: #{tpu_custom_call.1} parent=11 // pred_check_branch
          %248 = sbr.rel (%p246) target = $region36
        $region35: #{tpu_custom_call.1} parent=11 // pred_region
          _
        $region36: #{tpu_custom_call.1} parent=11 // pred_fallthru
          _
        // Predicated region
        $region37: #{tpu_custom_call.1} parent=11 // pred_check
          %p249 = pneg %p190
        $region38: #{tpu_custom_call.1} parent=11 // pred_check_branch
          %251 = sbr.rel (%p249) target = $region40
        $region39: #{tpu_custom_call.1} parent=11 // pred_region
          _
        $region40: #{tpu_custom_call.1} parent=11 // pred_fallthru
          _
      $region12: #{tpu_custom_call.1} parent=5 // pred_fallthru
        _
      %p252 = scmp.lt.s32.totalorder %s17, 2
      // Predicated region
      $region41: #{tpu_custom_call.1} parent=5 // pred_check
        %p253 = pneg %p252
      $region42: #{tpu_custom_call.1} parent=5 // pred_check_branch
        %255 = sbr.rel (%p253) target = $region44
      $region43: #{tpu_custom_call.1} parent=5 // pred_region
        // Predicated region
        $region45: #{tpu_custom_call.1} parent=43 // pred_check
          %p256 = pneg %p37
        $region46: #{tpu_custom_call.1} parent=43 // pred_check_branch
          %258 = sbr.rel (%p256) target = $region48
        $region47: #{tpu_custom_call.1} parent=43 // pred_region
          %p259 = scmp.lt.s32.totalorder %s17, 1
          %s260 = scalar_select %p259, %s17, 1
          %s261 = smul.addr %s260, 6
          %s262 = smul.addr %s261, 4
          %s263 = scalar_lea.vmem %s0, %s262
        $region48: #{tpu_custom_call.1} parent=43 // pred_fallthru
          _
      $region44: #{tpu_custom_call.1} parent=5 // pred_fallthru
        _
      %p264 = scmp.le.s32.totalorder 1, %s17
      %p265 = scmp.lt.s32.totalorder %s17, 3
      %p266 = pnand %p264, %p265
      %p267 = pneg %p266
      // Predicated region
      $region49: #{tpu_custom_call.1} parent=5 // pred_check
        _
      $region50: #{tpu_custom_call.1} parent=5 // pred_check_branch
        %269 = sbr.rel (%p266) target = $region52
      $region51: #{tpu_custom_call.1} parent=5 // pred_region
        %s270 = ssub.s32 %s17, 1
        %p271 = scmp.lt.s32.totalorder %s22, 1
        %s272 = scalar_select %p271, %s22, 1
        %s273 = smul.addr %s272, 6
        %s274 = smul.addr %s273, 4
        %s275 = scalar_lea.vmem %s0, %s274
        %p276 = pneg %p43
        %p277 = pneg %p40
        %p278 = pneg %p64
        %p279 = pneg %p61
        %p280 = pneg %p85
        %p281 = pneg %p82
        %p282 = pneg %p106
        %p283 = pneg %p103
        %p284 = pneg %p127
        %p285 = pneg %p124
        %p286 = pneg %p148
        %p287 = pneg %p145
        %p288 = pneg %p169
        %p289 = pneg %p166
        %p290 = pneg %p190
        %p291 = pneg %p187
        %p292 = pneg %p216
        %p293 = pneg %p213
        %s294 = sand.u32 %s203, 1
        %s295 = scalar_lea.sflag [#allocation4], %s294
        %s296 = sand.u32 %s203, 1
        %s297 = smul.addr %s296, 4
        %s298 = scalar_lea.vmem [#allocation3], %s297
        %p299 = scmp.lt.s32.totalorder %s22, 1
        %s300 = scalar_select %p299, %s22, 1
        %s301 = smul.addr %s300, 6
        %s302 = smul.addr %s301, 4
        %s303 = scalar_lea.vmem %s0, %s302
        %v305 = vld [vmem:[%s303] sm:$0x7]
        %v306 = vld [vmem:[%s1] sm:$0xf]
        %v307 = vld [vmem:[%s1 + $0x4] sm:$0xf]
        %v308 = vld [vmem:[%s1 + $0x8] sm:$0xf]
        %v309 = vld [vmem:[%s1 + $0xc] sm:$0xf]
        %v310 = vld [vmem:[%s1 + $0x10] sm:$0xf]
        %v311 = vld [vmem:[%s1 + $0x14] sm:$0xf]
        %v312 = vld [vmem:[%s1 + $0x18] sm:$0xf]
        %v313 = vld [vmem:[%s1 + $0x1c] sm:$0xf]
        %v314 = vld [vmem:[%s1 + $0x20] sm:$0xf]
        %v315 = vld [vmem:[%s1 + $0x24] sm:$0xf]
        %v316 = vld [vmem:[%s1 + $0x28] sm:$0xf]
        %v317 = vld [vmem:[%s1 + $0x2c] sm:$0xf]
        %v318 = vld [vmem:[%s1 + $0x30] sm:$0xf]
        %v319 = vld [vmem:[%s1 + $0x34] sm:$0xf]
        %v320 = vld [vmem:[%s1 + $0x38] sm:$0xf]
        %v321 = vld [vmem:[%s1 + $0x3c] sm:$0xf]
        %v338 = vunpack.c.l.b16 %v306
        %v339 = vunpack.c.l.b16 %v307
        %v340 = vunpack.c.l.b16 %v308
        %v341 = vunpack.c.l.b16 %v309
        %v342 = vunpack.c.l.b16 %v310
        %v343 = vunpack.c.l.b16 %v311
        %v344 = vunpack.c.l.b16 %v312
        %v345 = vunpack.c.l.b16 %v313
        %v346 = vunpack.c.l.b16 %v314
        %v347 = vunpack.c.l.b16 %v315
        %v348 = vunpack.c.l.b16 %v316
        %v349 = vunpack.c.l.b16 %v317
        %v350 = vunpack.c.l.b16 %v318
        %v351 = vunpack.c.l.b16 %v319
        %v352 = vunpack.c.l.b16 %v320
        %v353 = vunpack.c.l.b16 %v321
        %v354 = vpack.c.b16 %v339, %v338
        %v355 = vpack.c.b16 %v341, %v340
        %v356 = vpack.c.b16 %v343, %v342
        %v357 = vpack.c.b16 %v345, %v344
        %v358 = vpack.c.b16 %v347, %v346
        %v359 = vpack.c.b16 %v349, %v348
        %v360 = vpack.c.b16 %v351, %v350
        %v361 = vpack.c.b16 %v353, %v352
        %370 = vmatpush.bf16.msra.mxu0 %v361
        %371 = vmatpush.bf16.msra.mxu0 %v360
        %372 = vmatpush.bf16.msra.mxu0 %v359
        %373 = vmatpush.bf16.msra.mxu0 %v358
        %374 = vmatpush.bf16.msra.mxu0 %v357
        %375 = vmatpush.bf16.msra.mxu0 %v356
        %376 = vmatpush.bf16.msra.mxu0 %v355
        %377 = vmatpush.bf16.msra.mxu0 %v354
        %378 = vmatmul.bf16.gmra.mxu0 %v305
        %v379 = vpop.f32.mrf.mxu0
        %v380 = vadd.f32 0.0, %v379
        %v381 = vpop.f32.mrf.mxu0
        %382 = vdwg.mxu0
        %v383 = vtanh.pop %v380
        %vm384 = vcmask 259072
        %v385 = vsel %vm384, %v383, 0.0
        %386 = vadd.xlane.f32.xlu0 %v385
        %v387 = vpop.xlane.xlu0 %386
        %v388 = vrot.slane %v387, 4
        %v389 = vadd.f32 %v387, %v388
        %v390 = vrot.slane %v389, 2
        %v391 = vadd.f32 %v389, %v390
        %v392 = vrot.slane %v391, 1
        %v393 = vadd.f32 %v391, %v392
        %s394 = vtos %v393
        %s395 = sadd.f32 %s394, 0.0
        %v396 = vmul.f32 %v383, %v383
        %v397 = vsel %vm384, %v396, 0.0
        %398 = vadd.xlane.f32.xlu0 %v397
        %v399 = vpop.xlane.xlu0 %398
        %v400 = vrot.slane %v399, 4
        %v401 = vadd.f32 %v399, %v400
        %v402 = vrot.slane %v401, 2
        %v403 = vadd.f32 %v401, %v402
        %v404 = vrot.slane %v403, 1
        %v405 = vadd.f32 %v403, %v404
        %s406 = vtos %v405
        %s407 = sadd.f32 %s406, 0.0
        %v408 = vpack.c.bf16 %v383, %v383
        %vm409 = vcmask 256000
        %410 = vst.msk [vmem:[#allocation2] sm:$0x7] %vm409, %v408
        %s411 = scalar_lea.vmem %s303, 4
        %v412 = vld [vmem:[%s411] sm:$0x7]
        %v413 = vld [vmem:[%s1] sm:$0xf]
        %v414 = vld [vmem:[%s1 + $0x4] sm:$0xf]
        %v415 = vld [vmem:[%s1 + $0x8] sm:$0xf]
        %v416 = vld [vmem:[%s1 + $0xc] sm:$0xf]
        %v417 = vld [vmem:[%s1 + $0x10] sm:$0xf]
        %v418 = vld [vmem:[%s1 + $0x14] sm:$0xf]
        %v419 = vld [vmem:[%s1 + $0x18] sm:$0xf]
        %v420 = vld [vmem:[%s1 + $0x1c] sm:$0xf]
        %v421 = vld [vmem:[%s1 + $0x20] sm:$0xf]
        %v422 = vld [vmem:[%s1 + $0x24] sm:$0xf]
        %v423 = vld [vmem:[%s1 + $0x28] sm:$0xf]
        %v424 = vld [vmem:[%s1 + $0x2c] sm:$0xf]
        %v425 = vld [vmem:[%s1 + $0x30] sm:$0xf]
        %v426 = vld [vmem:[%s1 + $0x34] sm:$0xf]
        %v427 = vld [vmem:[%s1 + $0x38] sm:$0xf]
        %v428 = vld [vmem:[%s1 + $0x3c] sm:$0xf]
        %v445 = vunpack.c.l.b16 %v413
        %v446 = vunpack.c.l.b16 %v414
        %v447 = vunpack.c.l.b16 %v415
        %v448 = vunpack.c.l.b16 %v416
        %v449 = vunpack.c.l.b16 %v417
        %v450 = vunpack.c.l.b16 %v418
        %v451 = vunpack.c.l.b16 %v419
        %v452 = vunpack.c.l.b16 %v420
        %v453 = vunpack.c.l.b16 %v421
        %v454 = vunpack.c.l.b16 %v422
        %v455 = vunpack.c.l.b16 %v423
        %v456 = vunpack.c.l.b16 %v424
        %v457 = vunpack.c.l.b16 %v425
        %v458 = vunpack.c.l.b16 %v426
        %v459 = vunpack.c.l.b16 %v427
        %v460 = vunpack.c.l.b16 %v428
        %v461 = vpack.c.b16 %v446, %v445
        %v462 = vpack.c.b16 %v448, %v447
        %v463 = vpack.c.b16 %v450, %v449
        %v464 = vpack.c.b16 %v452, %v451
        %v465 = vpack.c.b16 %v454, %v453
        %v466 = vpack.c.b16 %v456, %v455
        %v467 = vpack.c.b16 %v458, %v457
        %v468 = vpack.c.b16 %v460, %v459
        %477 = vmatpush.bf16.msra.mxu0 %v468
        %478 = vmatpush.bf16.msra.mxu0 %v467
        %479 = vmatpush.bf16.msra.mxu0 %v466
        %480 = vmatpush.bf16.msra.mxu0 %v465
        %481 = vmatpush.bf16.msra.mxu0 %v464
        %482 = vmatpush.bf16.msra.mxu0 %v463
        %483 = vmatpush.bf16.msra.mxu0 %v462
        %484 = vmatpush.bf16.msra.mxu0 %v461
        %485 = vmatmul.bf16.gmra.mxu0 %v412
        %v486 = vpop.f32.mrf.mxu0
        %v487 = vadd.f32 0.0, %v486
        %v488 = vpop.f32.mrf.mxu0
        %489 = vdwg.mxu0
        %v490 = vtanh.pop %v487
        %v491 = vsel %vm384, %v490, 0.0
        %492 = vadd.xlane.f32.xlu0 %v491
        %v493 = vpop.xlane.xlu0 %492
        %v494 = vrot.slane %v493, 4
        %v495 = vadd.f32 %v493, %v494
        %v496 = vrot.slane %v495, 2
        %v497 = vadd.f32 %v495, %v496
        %v498 = vrot.slane %v497, 1
        %v499 = vadd.f32 %v497, %v498
        %s500 = vtos %v499
        %s501 = sadd.f32 %s395, %s500
        %v502 = vmul.f32 %v490, %v490
        %v503 = vsel %vm384, %v502, 0.0
        %504 = vadd.xlane.f32.xlu0 %v503
        %v505 = vpop.xlane.xlu0 %504
        %v506 = vrot.slane %v505, 4
        %v507 = vadd.f32 %v505, %v506
        %v508 = vrot.slane %v507, 2
        %v509 = vadd.f32 %v507, %v508
        %v510 = vrot.slane %v509, 1
        %v511 = vadd.f32 %v509, %v510
        %s512 = vtos %v511
        %s513 = sadd.f32 %s407, %s512
        %v514 = vpack.c.bf16 %v490, %v490
        %s515 = scalar_lea.vmem [#allocation2], 4
        %516 = vst.msk [vmem:[%s515] sm:$0x7] %vm409, %v514
        %s517 = scalar_lea.vmem %s303, 8
        %v518 = vld [vmem:[%s517] sm:$0x7]
        %v519 = vld [vmem:[%s1] sm:$0xf]
        %v520 = vld [vmem:[%s1 + $0x4] sm:$0xf]
        %v521 = vld [vmem:[%s1 + $0x8] sm:$0xf]
        %v522 = vld [vmem:[%s1 + $0xc] sm:$0xf]
        %v523 = vld [vmem:[%s1 + $0x10] sm:$0xf]
        %v524 = vld [vmem:[%s1 + $0x14] sm:$0xf]
        %v525 = vld [vmem:[%s1 + $0x18] sm:$0xf]
        %v526 = vld [vmem:[%s1 + $0x1c] sm:$0xf]
        %v527 = vld [vmem:[%s1 + $0x20] sm:$0xf]
        %v528 = vld [vmem:[%s1 + $0x24] sm:$0xf]
        %v529 = vld [vmem:[%s1 + $0x28] sm:$0xf]
        %v530 = vld [vmem:[%s1 + $0x2c] sm:$0xf]
        %v531 = vld [vmem:[%s1 + $0x30] sm:$0xf]
        %v532 = vld [vmem:[%s1 + $0x34] sm:$0xf]
        %v533 = vld [vmem:[%s1 + $0x38] sm:$0xf]
        %v534 = vld [vmem:[%s1 + $0x3c] sm:$0xf]
        %v551 = vunpack.c.l.b16 %v519
        %v552 = vunpack.c.l.b16 %v520
        %v553 = vunpack.c.l.b16 %v521
        %v554 = vunpack.c.l.b16 %v522
        %v555 = vunpack.c.l.b16 %v523
        %v556 = vunpack.c.l.b16 %v524
        %v557 = vunpack.c.l.b16 %v525
        %v558 = vunpack.c.l.b16 %v526
        %v559 = vunpack.c.l.b16 %v527
        %v560 = vunpack.c.l.b16 %v528
        %v561 = vunpack.c.l.b16 %v529
        %v562 = vunpack.c.l.b16 %v530
        %v563 = vunpack.c.l.b16 %v531
        %v564 = vunpack.c.l.b16 %v532
        %v565 = vunpack.c.l.b16 %v533
        %v566 = vunpack.c.l.b16 %v534
        %v567 = vpack.c.b16 %v552, %v551
        %v568 = vpack.c.b16 %v554, %v553
        %v569 = vpack.c.b16 %v556, %v555
        %v570 = vpack.c.b16 %v558, %v557
        %v571 = vpack.c.b16 %v560, %v559
        %v572 = vpack.c.b16 %v562, %v561
        %v573 = vpack.c.b16 %v564, %v563
        %v574 = vpack.c.b16 %v566, %v565
        %583 = vmatpush.bf16.msra.mxu0 %v574
        %584 = vmatpush.bf16.msra.mxu0 %v573
        %585 = vmatpush.bf16.msra.mxu0 %v572
        %586 = vmatpush.bf16.msra.mxu0 %v571
        %587 = vmatpush.bf16.msra.mxu0 %v570
        %588 = vmatpush.bf16.msra.mxu0 %v569
        %589 = vmatpush.bf16.msra.mxu0 %v568
        %590 = vmatpush.bf16.msra.mxu0 %v567
        %591 = vmatmul.bf16.gmra.mxu0 %v518
        %v592 = vpop.f32.mrf.mxu0
        %v593 = vadd.f32 0.0, %v592
        %v594 = vpop.f32.mrf.mxu0
        %595 = vdwg.mxu0
        %v596 = vtanh.pop %v593
        %v597 = vsel %vm384, %v596, 0.0
        %598 = vadd.xlane.f32.xlu0 %v597
        %v599 = vpop.xlane.xlu0 %598
        %v600 = vrot.slane %v599, 4
        %v601 = vadd.f32 %v599, %v600
        %v602 = vrot.slane %v601, 2
        %v603 = vadd.f32 %v601, %v602
        %v604 = vrot.slane %v603, 1
        %v605 = vadd.f32 %v603, %v604
        %s606 = vtos %v605
        %s607 = sadd.f32 %s501, %s606
        %v608 = vmul.f32 %v596, %v596
        %v609 = vsel %vm384, %v608, 0.0
        %610 = vadd.xlane.f32.xlu0 %v609
        %v611 = vpop.xlane.xlu0 %610
        %v612 = vrot.slane %v611, 4
        %v613 = vadd.f32 %v611, %v612
        %v614 = vrot.slane %v613, 2
        %v615 = vadd.f32 %v613, %v614
        %v616 = vrot.slane %v615, 1
        %v617 = vadd.f32 %v615, %v616
        %s618 = vtos %v617
        %s619 = sadd.f32 %s513, %s618
        %v620 = vpack.c.bf16 %v596, %v596
        %s621 = scalar_lea.vmem [#allocation2], 8
        %622 = vst.msk [vmem:[%s621] sm:$0x7] %vm409, %v620
        %s623 = scalar_lea.vmem %s303, 12
        %v624 = vld [vmem:[%s623] sm:$0x7]
        %v625 = vld [vmem:[%s1] sm:$0xf]
        %v626 = vld [vmem:[%s1 + $0x4] sm:$0xf]
        %v627 = vld [vmem:[%s1 + $0x8] sm:$0xf]
        %v628 = vld [vmem:[%s1 + $0xc] sm:$0xf]
        %v629 = vld [vmem:[%s1 + $0x10] sm:$0xf]
        %v630 = vld [vmem:[%s1 + $0x14] sm:$0xf]
        %v631 = vld [vmem:[%s1 + $0x18] sm:$0xf]
        %v632 = vld [vmem:[%s1 + $0x1c] sm:$0xf]
        %v633 = vld [vmem:[%s1 + $0x20] sm:$0xf]
        %v634 = vld [vmem:[%s1 + $0x24] sm:$0xf]
        %v635 = vld [vmem:[%s1 + $0x28] sm:$0xf]
        %v636 = vld [vmem:[%s1 + $0x2c] sm:$0xf]
        %v637 = vld [vmem:[%s1 + $0x30] sm:$0xf]
        %v638 = vld [vmem:[%s1 + $0x34] sm:$0xf]
        %v639 = vld [vmem:[%s1 + $0x38] sm:$0xf]
        %v640 = vld [vmem:[%s1 + $0x3c] sm:$0xf]
        %v657 = vunpack.c.l.b16 %v625
        %v658 = vunpack.c.l.b16 %v626
        %v659 = vunpack.c.l.b16 %v627
        %v660 = vunpack.c.l.b16 %v628
        %v661 = vunpack.c.l.b16 %v629
        %v662 = vunpack.c.l.b16 %v630
        %v663 = vunpack.c.l.b16 %v631
        %v664 = vunpack.c.l.b16 %v632
        %v665 = vunpack.c.l.b16 %v633
        %v666 = vunpack.c.l.b16 %v634
        %v667 = vunpack.c.l.b16 %v635
        %v668 = vunpack.c.l.b16 %v636
        %v669 = vunpack.c.l.b16 %v637
        %v670 = vunpack.c.l.b16 %v638
        %v671 = vunpack.c.l.b16 %v639
        %v672 = vunpack.c.l.b16 %v640
        %v673 = vpack.c.b16 %v658, %v657
        %v674 = vpack.c.b16 %v660, %v659
        %v675 = vpack.c.b16 %v662, %v661
        %v676 = vpack.c.b16 %v664, %v663
        %v677 = vpack.c.b16 %v666, %v665
        %v678 = vpack.c.b16 %v668, %v667
        %v679 = vpack.c.b16 %v670, %v669
        %v680 = vpack.c.b16 %v672, %v671
        %689 = vmatpush.bf16.msra.mxu0 %v680
        %690 = vmatpush.bf16.msra.mxu0 %v679
        %691 = vmatpush.bf16.msra.mxu0 %v678
        %692 = vmatpush.bf16.msra.mxu0 %v677
        %693 = vmatpush.bf16.msra.mxu0 %v676
        %694 = vmatpush.bf16.msra.mxu0 %v675
        %695 = vmatpush.bf16.msra.mxu0 %v674
        %696 = vmatpush.bf16.msra.mxu0 %v673
        %697 = vmatmul.bf16.gmra.mxu0 %v624
        %v698 = vpop.f32.mrf.mxu0
        %v699 = vadd.f32 0.0, %v698
        %v700 = vpop.f32.mrf.mxu0
        %701 = vdwg.mxu0
        %v702 = vtanh.pop %v699
        %v703 = vsel %vm384, %v702, 0.0
        %704 = vadd.xlane.f32.xlu0 %v703
        %v705 = vpop.xlane.xlu0 %704
        %v706 = vrot.slane %v705, 4
        %v707 = vadd.f32 %v705, %v706
        %v708 = vrot.slane %v707, 2
        %v709 = vadd.f32 %v707, %v708
        %v710 = vrot.slane %v709, 1
        %v711 = vadd.f32 %v709, %v710
        %s712 = vtos %v711
        %s713 = sadd.f32 %s607, %s712
        %v714 = vmul.f32 %v702, %v702
        %v715 = vsel %vm384, %v714, 0.0
        %716 = vadd.xlane.f32.xlu0 %v715
        %v717 = vpop.xlane.xlu0 %716
        %v718 = vrot.slane %v717, 4
        %v719 = vadd.f32 %v717, %v718
        %v720 = vrot.slane %v719, 2
        %v721 = vadd.f32 %v719, %v720
        %v722 = vrot.slane %v721, 1
        %v723 = vadd.f32 %v721, %v722
        %s724 = vtos %v723
        %s725 = sadd.f32 %s619, %s724
        %v726 = vpack.c.bf16 %v702, %v702
        %s727 = scalar_lea.vmem [#allocation2], 12
        %728 = vst.msk [vmem:[%s727] sm:$0x7] %vm409, %v726
        %s729 = scalar_lea.vmem %s303, 16
        %v730 = vld [vmem:[%s729] sm:$0x7]
        %v731 = vld [vmem:[%s1] sm:$0xf]
        %v732 = vld [vmem:[%s1 + $0x4] sm:$0xf]
        %v733 = vld [vmem:[%s1 + $0x8] sm:$0xf]
        %v734 = vld [vmem:[%s1 + $0xc] sm:$0xf]
        %v735 = vld [vmem:[%s1 + $0x10] sm:$0xf]
        %v736 = vld [vmem:[%s1 + $0x14] sm:$0xf]
        %v737 = vld [vmem:[%s1 + $0x18] sm:$0xf]
        %v738 = vld [vmem:[%s1 + $0x1c] sm:$0xf]
        %v739 = vld [vmem:[%s1 + $0x20] sm:$0xf]
        %v740 = vld [vmem:[%s1 + $0x24] sm:$0xf]
        %v741 = vld [vmem:[%s1 + $0x28] sm:$0xf]
        %v742 = vld [vmem:[%s1 + $0x2c] sm:$0xf]
        %v743 = vld [vmem:[%s1 + $0x30] sm:$0xf]
        %v744 = vld [vmem:[%s1 + $0x34] sm:$0xf]
        %v745 = vld [vmem:[%s1 + $0x38] sm:$0xf]
        %v746 = vld [vmem:[%s1 + $0x3c] sm:$0xf]
        %v763 = vunpack.c.l.b16 %v731
        %v764 = vunpack.c.l.b16 %v732
        %v765 = vunpack.c.l.b16 %v733
        %v766 = vunpack.c.l.b16 %v734
        %v767 = vunpack.c.l.b16 %v735
        %v768 = vunpack.c.l.b16 %v736
        %v769 = vunpack.c.l.b16 %v737
        %v770 = vunpack.c.l.b16 %v738
        %v771 = vunpack.c.l.b16 %v739
        %v772 = vunpack.c.l.b16 %v740
        %v773 = vunpack.c.l.b16 %v741
        %v774 = vunpack.c.l.b16 %v742
        %v775 = vunpack.c.l.b16 %v743
        %v776 = vunpack.c.l.b16 %v744
        %v777 = vunpack.c.l.b16 %v745
        %v778 = vunpack.c.l.b16 %v746
        %v779 = vpack.c.b16 %v764, %v763
        %v780 = vpack.c.b16 %v766, %v765
        %v781 = vpack.c.b16 %v768, %v767
        %v782 = vpack.c.b16 %v770, %v769
        %v783 = vpack.c.b16 %v772, %v771
        %v784 = vpack.c.b16 %v774, %v773
        %v785 = vpack.c.b16 %v776, %v775
        %v786 = vpack.c.b16 %v778, %v777
        %795 = vmatpush.bf16.msra.mxu0 %v786
        %796 = vmatpush.bf16.msra.mxu0 %v785
        %797 = vmatpush.bf16.msra.mxu0 %v784
        %798 = vmatpush.bf16.msra.mxu0 %v783
        %799 = vmatpush.bf16.msra.mxu0 %v782
        %800 = vmatpush.bf16.msra.mxu0 %v781
        %801 = vmatpush.bf16.msra.mxu0 %v780
        %802 = vmatpush.bf16.msra.mxu0 %v779
        %803 = vmatmul.bf16.gmra.mxu0 %v730
        %v804 = vpop.f32.mrf.mxu0
        %v805 = vadd.f32 0.0, %v804
        %v806 = vpop.f32.mrf.mxu0
        %807 = vdwg.mxu0
        %v808 = vtanh.pop %v805
        %v809 = vsel %vm384, %v808, 0.0
        %810 = vadd.xlane.f32.xlu0 %v809
        %v811 = vpop.xlane.xlu0 %810
        %v812 = vrot.slane %v811, 4
        %v813 = vadd.f32 %v811, %v812
        %v814 = vrot.slane %v813, 2
        %v815 = vadd.f32 %v813, %v814
        %v816 = vrot.slane %v815, 1
        %v817 = vadd.f32 %v815, %v816
        %s818 = vtos %v817
        %s819 = sadd.f32 %s713, %s818
        %v820 = vmul.f32 %v808, %v808
        %v821 = vsel %vm384, %v820, 0.0
        %822 = vadd.xlane.f32.xlu0 %v821
        %v823 = vpop.xlane.xlu0 %822
        %v824 = vrot.slane %v823, 4
        %v825 = vadd.f32 %v823, %v824
        %v826 = vrot.slane %v825, 2
        %v827 = vadd.f32 %v825, %v826
        %v828 = vrot.slane %v827, 1
        %v829 = vadd.f32 %v827, %v828
        %s830 = vtos %v829
        %s831 = sadd.f32 %s725, %s830
        %v832 = vpack.c.bf16 %v808, %v808
        %s833 = scalar_lea.vmem [#allocation2], 16
        %834 = vst.msk [vmem:[%s833] sm:$0x7] %vm409, %v832
        %s835 = scalar_lea.vmem %s303, 20
        %v836 = vld [vmem:[%s835] sm:$0x7]
        %v837 = vld [vmem:[%s1] sm:$0xf]
        %v838 = vld [vmem:[%s1 + $0x4] sm:$0xf]
        %v839 = vld [vmem:[%s1 + $0x8] sm:$0xf]
        %v840 = vld [vmem:[%s1 + $0xc] sm:$0xf]
        %v841 = vld [vmem:[%s1 + $0x10] sm:$0xf]
        %v842 = vld [vmem:[%s1 + $0x14] sm:$0xf]
        %v843 = vld [vmem:[%s1 + $0x18] sm:$0xf]
        %v844 = vld [vmem:[%s1 + $0x1c] sm:$0xf]
        %v845 = vld [vmem:[%s1 + $0x20] sm:$0xf]
        %v846 = vld [vmem:[%s1 + $0x24] sm:$0xf]
        %v847 = vld [vmem:[%s1 + $0x28] sm:$0xf]
        %v848 = vld [vmem:[%s1 + $0x2c] sm:$0xf]
        %v849 = vld [vmem:[%s1 + $0x30] sm:$0xf]
        %v850 = vld [vmem:[%s1 + $0x34] sm:$0xf]
        %v851 = vld [vmem:[%s1 + $0x38] sm:$0xf]
        %v852 = vld [vmem:[%s1 + $0x3c] sm:$0xf]
        %v869 = vunpack.c.l.b16 %v837
        %v870 = vunpack.c.l.b16 %v838
        %v871 = vunpack.c.l.b16 %v839
        %v872 = vunpack.c.l.b16 %v840
        %v873 = vunpack.c.l.b16 %v841
        %v874 = vunpack.c.l.b16 %v842
        %v875 = vunpack.c.l.b16 %v843
        %v876 = vunpack.c.l.b16 %v844
        %v877 = vunpack.c.l.b16 %v845
        %v878 = vunpack.c.l.b16 %v846
        %v879 = vunpack.c.l.b16 %v847
        %v880 = vunpack.c.l.b16 %v848
        %v881 = vunpack.c.l.b16 %v849
        %v882 = vunpack.c.l.b16 %v850
        %v883 = vunpack.c.l.b16 %v851
        %v884 = vunpack.c.l.b16 %v852
        %v885 = vpack.c.b16 %v870, %v869
        %v886 = vpack.c.b16 %v872, %v871
        %v887 = vpack.c.b16 %v874, %v873
        %v888 = vpack.c.b16 %v876, %v875
        %v889 = vpack.c.b16 %v878, %v877
        %v890 = vpack.c.b16 %v880, %v879
        %v891 = vpack.c.b16 %v882, %v881
        %v892 = vpack.c.b16 %v884, %v883
        %901 = vmatpush.bf16.msra.mxu0 %v892
        %902 = vmatpush.bf16.msra.mxu0 %v891
        %903 = vmatpush.bf16.msra.mxu0 %v890
        %904 = vmatpush.bf16.msra.mxu0 %v889
        %905 = vmatpush.bf16.msra.mxu0 %v888
        %906 = vmatpush.bf16.msra.mxu0 %v887
        %907 = vmatpush.bf16.msra.mxu0 %v886
        %908 = vmatpush.bf16.msra.mxu0 %v885
        %909 = vmatmul.bf16.gmra.mxu0 %v836
        %v910 = vpop.f32.mrf.mxu0
        %v911 = vadd.f32 0.0, %v910
        %v912 = vpop.f32.mrf.mxu0
        %913 = vdwg.mxu0
        %v914 = vtanh.pop %v911
        %v915 = vsel %vm384, %v914, 0.0
        %916 = vadd.xlane.f32.xlu0 %v915
        %v917 = vpop.xlane.xlu0 %916
        %v918 = vrot.slane %v917, 4
        %v919 = vadd.f32 %v917, %v918
        %v920 = vrot.slane %v919, 2
        %v921 = vadd.f32 %v919, %v920
        %v922 = vrot.slane %v921, 1
        %v923 = vadd.f32 %v921, %v922
        %s924 = vtos %v923
        %s925 = sadd.f32 %s819, %s924
        %v926 = vmul.f32 %v914, %v914
        %v927 = vsel %vm384, %v926, 0.0
        %928 = vadd.xlane.f32.xlu0 %v927
        %v929 = vpop.xlane.xlu0 %928
        %v930 = vrot.slane %v929, 4
        %v931 = vadd.f32 %v929, %v930
        %v932 = vrot.slane %v931, 2
        %v933 = vadd.f32 %v931, %v932
        %v934 = vrot.slane %v933, 1
        %v935 = vadd.f32 %v933, %v934
        %s936 = vtos %v935
        %s937 = sadd.f32 %s831, %s936
        %v938 = vpack.c.bf16 %v914, %v914
        %s939 = scalar_lea.vmem [#allocation2], 20
        %940 = vst.msk [vmem:[%s939] sm:$0x7] %vm409, %v938
        %v941 = vrcp.pop 992.0
        %v942 = vmul.f32 992.0, %v941
        %v943 = vsub.f32 1.0, %v942
        %v944 = vmul.f32 %v941, %v943
        %v945 = vadd.f32 %v941, %v944
        %vm946 = vweird.f32 %v941
        %v947 = vsel %vm946, %v941, %v945
        %s948 = vtos %v947
        %s949 = smul.f32 %s925, %s948
        %v950 = vrcp.pop 992.0
        %v951 = vmul.f32 992.0, %v950
        %v952 = vsub.f32 1.0, %v951
        %v953 = vmul.f32 %v950, %v952
        %v954 = vadd.f32 %v950, %v953
        %vm955 = vweird.f32 %v950
        %v956 = vsel %vm955, %v950, %v954
        %s957 = vtos %v956
        %s958 = smul.f32 %s937, %s957
        %s959 = smul.f32 %s949, %s949
        %s960 = ssub.f32 %s958, %s959
        %s961 = sadd.f32 %s960, 1e-05
        %v962 = vstv %s961
        %v963 = vrsqrt.pop %v962
        %v964 = vmul.f32 %v963, %v962
        %v965 = vmul.f32 %v964, %v963
        %v966 = vmul.f32 0.5, %v965
        %v967 = vsub.f32 1.5, %v966
        %v968 = vmul.f32 %v963, %v967
        %vm969 = vweird.f32 %v962
        %vm970 = vweird.f32 %v963
        %vm971 = vmor %vm969, %vm970
        %v972 = vsel %vm971, %v963, %v968
        %s973 = vtos %v972
        %v974 = vld [vmem:[%s2] sm:$0x1]
        %v975 = vstv %s973
        %v976 = vmul.f32 %v975, %v974
        %v977 = vld [vmem:[%s3] sm:$0x1]
        %v978 = vstv %s949
        %v979 = vmul.f32 %v978, %v976
        %v980 = vsub.f32 %v977, %v979
        %v981 = vld [vmem:[#allocation2] sm:$0x7]
        %v982 = vunpack.c.l.bf16 %v981
        %v984 = vperm.slane %v976, 0
        %v986 = vmul.f32 %v982, %v984
        %v988 = vperm.slane %v980, 0
        %v990 = vadd.f32 %v986, %v988
        %v991 = vpack.c.bf16 %v990, %v990
        %992 = vst.msk [vmem:[#allocation2] sm:$0x7] %vm409, %v991
        %v993 = vld [vmem:[%s515] sm:$0x7]
        %v994 = vunpack.c.l.bf16 %v993
        %v995 = vmul.f32 %v994, %v984
        %v996 = vadd.f32 %v995, %v988
        %v997 = vpack.c.bf16 %v996, %v996
        %998 = vst.msk [vmem:[%s515] sm:$0x7] %vm409, %v997
        %v999 = vld [vmem:[%s621] sm:$0x7]
        %v1000 = vunpack.c.l.bf16 %v999
        %v1001 = vmul.f32 %v1000, %v984
        %v1002 = vadd.f32 %v1001, %v988
        %v1003 = vpack.c.bf16 %v1002, %v1002
        %1004 = vst.msk [vmem:[%s621] sm:$0x7] %vm409, %v1003
        %v1005 = vld [vmem:[%s727] sm:$0x7]
        %v1006 = vunpack.c.l.bf16 %v1005
        %v1007 = vmul.f32 %v1006, %v984
        %v1008 = vadd.f32 %v1007, %v988
        %v1009 = vpack.c.bf16 %v1008, %v1008
        %1010 = vst.msk [vmem:[%s727] sm:$0x7] %vm409, %v1009
        %v1011 = vld [vmem:[%s833] sm:$0x7]
        %v1012 = vunpack.c.l.bf16 %v1011
        %v1013 = vmul.f32 %v1012, %v984
        %v1014 = vadd.f32 %v1013, %v988
        %v1015 = vpack.c.bf16 %v1014, %v1014
        %1016 = vst.msk [vmem:[%s833] sm:$0x7] %vm409, %v1015
        %v1017 = vld [vmem:[%s939] sm:$0x7]
        %v1018 = vunpack.c.l.bf16 %v1017
        %v1019 = vmul.f32 %v1018, %v984
        %v1020 = vadd.f32 %v1019, %v988
        %v1021 = vpack.c.bf16 %v1020, %v1020
        %1022 = vst.msk [vmem:[%s939] sm:$0x7] %vm409, %v1021
        %v1023 = vld [vmem:[#allocation2] sm:$0x7]
        %v1024 = vld [vmem:[%s4] sm:$0xf]
        %v1025 = vld [vmem:[%s4 + $0x4] sm:$0xf]
        %v1026 = vld [vmem:[%s4 + $0x8] sm:$0xf]
        %v1027 = vld [vmem:[%s4 + $0xc] sm:$0xf]
        %v1028 = vld [vmem:[%s515] sm:$0x7]
        %s1029 = scalar_lea.vmem %s4, 16
        %v1030 = vld [vmem:[%s1029] sm:$0xf]
        %v1031 = vld [vmem:[%s1029 + $0x4] sm:$0xf]
        %v1032 = vld [vmem:[%s1029 + $0x8] sm:$0xf]
        %v1033 = vld [vmem:[%s1029 + $0xc] sm:$0xf]
        %v1038 = vunpack.c.l.b16 %v1030
        %v1039 = vunpack.c.l.b16 %v1031
        %v1040 = vunpack.c.l.b16 %v1032
        %v1041 = vunpack.c.l.b16 %v1033
        %v1042 = vpack.c.b16 %v1039, %v1038
        %v1043 = vpack.c.b16 %v1041, %v1040
        %vm1046 = vcmask 261120
        %v1048 = vsel %vm1046, %v1028, 0
        %1050 = vmatpush.bf16.msra.mxu0 0
        %1051 = vmatpush.bf16.msra.mxu0 0
        %1052 = vmatpush.bf16.msra.mxu0 0
        %1053 = vmatpush.bf16.msra.mxu0 0
        %1054 = vmatpush.bf16.msra.mxu0 0
        %1055 = vmatpush.bf16.msra.mxu0 0
        %1056 = vmatpush.bf16.msra.mxu0 %v1043
        %1057 = vmatpush.bf16.msra.mxu0 %v1042
        %1058 = vmatmul.bf16.gmra.mxu0 %v1048
        %v1059 = vpop.f32.mrf.mxu0
        %v1060 = vadd.f32 0.0, %v1059
        %v1061 = vpop.f32.mrf.mxu0
        %1062 = vdwg.mxu0
        %v1067 = vunpack.c.l.b16 %v1024
        %v1068 = vunpack.c.l.b16 %v1025
        %v1069 = vunpack.c.l.b16 %v1026
        %v1070 = vunpack.c.l.b16 %v1027
        %v1071 = vpack.c.b16 %v1068, %v1067
        %v1072 = vpack.c.b16 %v1070, %v1069
        %v1076 = vsel %vm1046, %v1023, 0
        %1078 = vmatpush.bf16.msra.mxu0 0
        %1079 = vmatpush.bf16.msra.mxu0 0
        %1080 = vmatpush.bf16.msra.mxu0 0
        %1081 = vmatpush.bf16.msra.mxu0 0
        %1082 = vmatpush.bf16.msra.mxu0 0
        %1083 = vmatpush.bf16.msra.mxu0 0
        %1084 = vmatpush.bf16.msra.mxu0 %v1072
        %1085 = vmatpush.bf16.msra.mxu0 %v1071
        %1086 = vmatmul.bf16.gmra.mxu0 %v1076
        %v1087 = vpop.f32.mrf.mxu0
        %v1088 = vadd.f32 %v1060, %v1087
        %v1089 = vpop.f32.mrf.mxu0
        %1090 = vdwg.mxu0
        %v1091 = vld [vmem:[%s621] sm:$0x7]
        %s1092 = scalar_lea.vmem %s4, 32
        %v1093 = vld [vmem:[%s1092] sm:$0xf]
        %v1094 = vld [vmem:[%s1092 + $0x4] sm:$0xf]
        %v1095 = vld [vmem:[%s1092 + $0x8] sm:$0xf]
        %v1096 = vld [vmem:[%s1092 + $0xc] sm:$0xf]
        %v1101 = vunpack.c.l.b16 %v1093
        %v1102 = vunpack.c.l.b16 %v1094
        %v1103 = vunpack.c.l.b16 %v1095
        %v1104 = vunpack.c.l.b16 %v1096
        %v1105 = vpack.c.b16 %v1102, %v1101
        %v1106 = vpack.c.b16 %v1104, %v1103
        %v1110 = vsel %vm1046, %v1091, 0
        %1112 = vmatpush.bf16.msra.mxu0 0
        %1113 = vmatpush.bf16.msra.mxu0 0
        %1114 = vmatpush.bf16.msra.mxu0 0
        %1115 = vmatpush.bf16.msra.mxu0 0
        %1116 = vmatpush.bf16.msra.mxu0 0
        %1117 = vmatpush.bf16.msra.mxu0 0
        %1118 = vmatpush.bf16.msra.mxu0 %v1106
        %1119 = vmatpush.bf16.msra.mxu0 %v1105
        %1120 = vmatmul.bf16.gmra.mxu0 %v1110
        %v1121 = vpop.f32.mrf.mxu0
        %v1122 = vadd.f32 0.0, %v1121
        %v1123 = vpop.f32.mrf.mxu0
        %1124 = vdwg.mxu0
        %v1125 = vadd.f32 %v1088, %v1122
        %v1126 = vld [vmem:[%s727] sm:$0x7]
        %s1127 = scalar_lea.vmem %s4, 48
        %v1128 = vld [vmem:[%s1127] sm:$0xf]
        %v1129 = vld [vmem:[%s1127 + $0x4] sm:$0xf]
        %v1130 = vld [vmem:[%s1127 + $0x8] sm:$0xf]
        %v1131 = vld [vmem:[%s1127 + $0xc] sm:$0xf]
        %v1136 = vunpack.c.l.b16 %v1128
        %v1137 = vunpack.c.l.b16 %v1129
        %v1138 = vunpack.c.l.b16 %v1130
        %v1139 = vunpack.c.l.b16 %v1131
        %v1140 = vpack.c.b16 %v1137, %v1136
        %v1141 = vpack.c.b16 %v1139, %v1138
        %v1145 = vsel %vm1046, %v1126, 0
        %1147 = vmatpush.bf16.msra.mxu0 0
        %1148 = vmatpush.bf16.msra.mxu0 0
        %1149 = vmatpush.bf16.msra.mxu0 0
        %1150 = vmatpush.bf16.msra.mxu0 0
        %1151 = vmatpush.bf16.msra.mxu0 0
        %1152 = vmatpush.bf16.msra.mxu0 0
        %1153 = vmatpush.bf16.msra.mxu0 %v1141
        %1154 = vmatpush.bf16.msra.mxu0 %v1140
        %1155 = vmatmul.bf16.gmra.mxu0 %v1145
        %v1156 = vpop.f32.mrf.mxu0
        %v1157 = vadd.f32 0.0, %v1156
        %v1158 = vpop.f32.mrf.mxu0
        %1159 = vdwg.mxu0
        %v1160 = vadd.f32 %v1125, %v1157
        %v1161 = vld [vmem:[%s833] sm:$0x7]
        %s1162 = scalar_lea.vmem %s4, 64
        %v1163 = vld [vmem:[%s1162] sm:$0xf]
        %v1164 = vld [vmem:[%s1162 + $0x4] sm:$0xf]
        %v1165 = vld [vmem:[%s1162 + $0x8] sm:$0xf]
        %v1166 = vld [vmem:[%s1162 + $0xc] sm:$0xf]
        %v1171 = vunpack.c.l.b16 %v1163
        %v1172 = vunpack.c.l.b16 %v1164
        %v1173 = vunpack.c.l.b16 %v1165
        %v1174 = vunpack.c.l.b16 %v1166
        %v1175 = vpack.c.b16 %v1172, %v1171
        %v1176 = vpack.c.b16 %v1174, %v1173
        %v1180 = vsel %vm1046, %v1161, 0
        %1182 = vmatpush.bf16.msra.mxu0 0
        %1183 = vmatpush.bf16.msra.mxu0 0
        %1184 = vmatpush.bf16.msra.mxu0 0
        %1185 = vmatpush.bf16.msra.mxu0 0
        %1186 = vmatpush.bf16.msra.mxu0 0
        %1187 = vmatpush.bf16.msra.mxu0 0
        %1188 = vmatpush.bf16.msra.mxu0 %v1176
        %1189 = vmatpush.bf16.msra.mxu0 %v1175
        %1190 = vmatmul.bf16.gmra.mxu0 %v1180
        %v1191 = vpop.f32.mrf.mxu0
        %v1192 = vadd.f32 0.0, %v1191
        %v1193 = vpop.f32.mrf.mxu0
        %1194 = vdwg.mxu0
        %v1195 = vadd.f32 %v1160, %v1192
        %v1196 = vld [vmem:[%s939] sm:$0x7]
        %s1197 = scalar_lea.vmem %s4, 80
        %v1198 = vld [vmem:[%s1197] sm:$0xf]
        %v1199 = vld [vmem:[%s1197 + $0x4] sm:$0xf]
        %v1200 = vld [vmem:[%s1197 + $0x8] sm:$0xf]
        %v1201 = vld [vmem:[%s1197 + $0xc] sm:$0xf]
        %v1206 = vunpack.c.l.b16 %v1198
        %v1207 = vunpack.c.l.b16 %v1199
        %v1208 = vunpack.c.l.b16 %v1200
        %v1209 = vunpack.c.l.b16 %v1201
        %v1210 = vpack.c.b16 %v1207, %v1206
        %v1211 = vpack.c.b16 %v1209, %v1208
        %v1215 = vsel %vm1046, %v1196, 0
        %1217 = vmatpush.bf16.msra.mxu0 0
        %1218 = vmatpush.bf16.msra.mxu0 0
        %1219 = vmatpush.bf16.msra.mxu0 0
        %1220 = vmatpush.bf16.msra.mxu0 0
        %1221 = vmatpush.bf16.msra.mxu0 0
        %1222 = vmatpush.bf16.msra.mxu0 0
        %1223 = vmatpush.bf16.msra.mxu0 %v1211
        %1224 = vmatpush.bf16.msra.mxu0 %v1210
        %1225 = vmatmul.bf16.gmra.mxu0 %v1215
        %v1226 = vpop.f32.mrf.mxu0
        %v1227 = vadd.f32 0.0, %v1226
        %v1228 = vpop.f32.mrf.mxu0
        %1229 = vdwg.mxu0
        %v1230 = vadd.f32 %v1195, %v1227
        %s1231 = scalar_lea.vmem %s4, 96
        %v1232 = vld [vmem:[%s1231] sm:$0xf]
        %v1233 = vld [vmem:[%s1231 + $0x4] sm:$0xf]
        %v1234 = vld [vmem:[%s1231 + $0x8] sm:$0xf]
        %v1235 = vld [vmem:[%s1231 + $0xc] sm:$0xf]
        %v1237 = vunpack.c.l.b16 %v1023
        %v1238 = vpack.c.b16 %v1237, %v1237
        %v1240 = vshrl.u32 %v1238, 16
        %v1242 = vshll.u32 %v1238, 16
        %v1244 = vrot.slane %v1242, 1
        %v1245 = vor.u32 %v1240, %v1244
        %v1250 = vunpack.c.l.b16 %v1232
        %v1251 = vunpack.c.l.b16 %v1233
        %v1252 = vunpack.c.l.b16 %v1234
        %v1253 = vunpack.c.l.b16 %v1235
        %v1254 = vpack.c.b16 %v1251, %v1250
        %v1255 = vpack.c.b16 %v1253, %v1252
        %v1259 = vsel %vm1046, %v1245, 0
        %1261 = vmatpush.bf16.msra.mxu0 0
        %1262 = vmatpush.bf16.msra.mxu0 0
        %1263 = vmatpush.bf16.msra.mxu0 0
        %1264 = vmatpush.bf16.msra.mxu0 0
        %1265 = vmatpush.bf16.msra.mxu0 0
        %1266 = vmatpush.bf16.msra.mxu0 0
        %1267 = vmatpush.bf16.msra.mxu0 %v1255
        %1268 = vmatpush.bf16.msra.mxu0 %v1254
        %1269 = vmatmul.bf16.gmra.mxu0 %v1259
        %v1270 = vpop.f32.mrf.mxu0
        %v1271 = vadd.f32 0.0, %v1270
        %v1272 = vpop.f32.mrf.mxu0
        %1273 = vdwg.mxu0
        %v1274 = vadd.f32 %v1230, %v1271
        %v1275 = vld [vmem:[%s5] sm:$0x1]
        %v1277 = vperm.slane %v1275, 0
        %v1279 = vadd.f32 %v1274, %v1277
        %v1280 = vmul.f32 %v1279, 0.5
        %v1281 = vmul.f32 %v1279, 0.70710677
        %v1282 = vmul.f32 %v1281, %v1281
        %v1283 = vmin.f32 16.0, %v1282
        %v1284 = vmul.f32 %v1283, 2.1237322e-06
        %v1285 = vadd.f32 %v1284, 0.00028619796
        %v1286 = vmul.f32 %v1283, %v1285
        %v1287 = vadd.f32 %v1286, 0.0036580483
        %v1288 = vmul.f32 %v1283, %v1287
        %v1289 = vadd.f32 %v1288, 0.05243302
        %v1290 = vmul.f32 %v1283, %v1289
        %v1291 = vadd.f32 %v1290, 0.18741608
        %v1292 = vmul.f32 %v1283, %v1291
        %v1293 = vadd.f32 %v1292, 1.1283791
        %v1294 = vmul.f32 %v1281, %v1293
        %v1295 = vmul.f32 %v1283, 3.8918573e-05
        %v1296 = vadd.f32 %v1295, 0.001143296
        %v1297 = vmul.f32 %v1283, %v1296
        %v1298 = vadd.f32 %v1297, 0.014752088
        %v1299 = vmul.f32 %v1283, %v1298
        %v1300 = vadd.f32 %v1299, 0.112945676
        %v1301 = vmul.f32 %v1283, %v1300
        %v1302 = vadd.f32 %v1301, 0.4994258
        %v1303 = vmul.f32 %v1283, %v1302
        %v1304 = vadd.f32 %v1303, 1.0
        %v1305 = vrcp.pop %v1304
        %v1306 = vmul.f32 %v1304, %v1305
        %v1307 = vsub.f32 1.0, %v1306
        %v1308 = vmul.f32 %v1305, %v1307
        %v1309 = vadd.f32 %v1305, %v1308
        %vm1310 = vweird.f32 %v1304
        %vm1311 = vweird.f32 %v1305
        %vm1312 = vmor %vm1310, %vm1311
        %v1313 = vsel %vm1312, %v1305, %v1309
        %v1314 = vand.u32 2147483647, %v1304
        %vm1315 = vcmp.eq.f32.partialorder %v1314, 8.507059e+37
        %v1316 = vand.u32 %v1304, 2147483648
        %v1317 = vor.u32 1.1754944e-38, %v1316
        %v1318 = vsel %vm1315, %v1317, %v1313
        %v1319 = vmul.f32 %v1294, %v1318
        %v1320 = vmin.f32 %v1319, 1.0
        %v1321 = vmax.f32 %v1320, -1.0
        %v1322 = vadd.f32 %v1321, 1.0
        %v1323 = vmul.f32 %v1280, %v1322
        %v1324 = vpack.c.bf16 %v1323, %v1323
        %v1325 = vld [vmem:[%s727] sm:$0x3]
        %v1326 = vld [vmem:[%s833] sm:$0x3]
        %v1328 = vsel %vm1046, %v1326, 0
        %1330 = vmatpush.bf16.msra.mxu0 0
        %1331 = vmatpush.bf16.msra.mxu0 0
        %1332 = vmatpush.bf16.msra.mxu0 0
        %1333 = vmatpush.bf16.msra.mxu0 0
        %1334 = vmatpush.bf16.msra.mxu0 0
        %1335 = vmatpush.bf16.msra.mxu0 0
        %1336 = vmatpush.bf16.msra.mxu0 %v1043
        %1337 = vmatpush.bf16.msra.mxu0 %v1042
        %1338 = vmatmul.bf16.gmra.mxu0 %v1328
        %v1339 = vpop.f32.mrf.mxu0
        %v1340 = vadd.f32 0.0, %v1339
        %v1341 = vpop.f32.mrf.mxu0
        %1342 = vdwg.mxu0
        %v1344 = vsel %vm1046, %v1325, 0
        %1346 = vmatpush.bf16.msra.mxu0 0
        %1347 = vmatpush.bf16.msra.mxu0 0
        %1348 = vmatpush.bf16.msra.mxu0 0
        %1349 = vmatpush.bf16.msra.mxu0 0
        %1350 = vmatpush.bf16.msra.mxu0 0
        %1351 = vmatpush.bf16.msra.mxu0 0
        %1352 = vmatpush.bf16.msra.mxu0 %v1072
        %1353 = vmatpush.bf16.msra.mxu0 %v1071
        %1354 = vmatmul.bf16.gmra.mxu0 %v1344
        %v1355 = vpop.f32.mrf.mxu0
        %v1356 = vadd.f32 %v1340, %v1355
        %v1357 = vpop.f32.mrf.mxu0
        %1358 = vdwg.mxu0
        %v1359 = vld [vmem:[%s939] sm:$0x3]
        %v1361 = vsel %vm1046, %v1359, 0
        %1363 = vmatpush.bf16.msra.mxu0 0
        %1364 = vmatpush.bf16.msra.mxu0 0
        %1365 = vmatpush.bf16.msra.mxu0 0
        %1366 = vmatpush.bf16.msra.mxu0 0
        %1367 = vmatpush.bf16.msra.mxu0 0
        %1368 = vmatpush.bf16.msra.mxu0 0
        %1369 = vmatpush.bf16.msra.mxu0 %v1106
        %1370 = vmatpush.bf16.msra.mxu0 %v1105
        %1371 = vmatmul.bf16.gmra.mxu0 %v1361
        %v1372 = vpop.f32.mrf.mxu0
        %v1373 = vadd.f32 0.0, %v1372
        %v1374 = vpop.f32.mrf.mxu0
        %1375 = vdwg.mxu0
        %v1376 = vadd.f32 %v1356, %v1373
        %1377 = vmatpush.bf16.msra.mxu0 0
        %1378 = vmatpush.bf16.msra.mxu0 0
        %1379 = vmatpush.bf16.msra.mxu0 0
        %1380 = vmatpush.bf16.msra.mxu0 0
        %1381 = vmatpush.bf16.msra.mxu0 0
        %1382 = vmatpush.bf16.msra.mxu0 0
        %1383 = vmatpush.bf16.msra.mxu0 %v1141
        %1384 = vmatpush.bf16.msra.mxu0 %v1140
        %1385 = vmatmul.bf16.gmra.mxu0 %v1259
        %v1386 = vpop.f32.mrf.mxu0
        %v1387 = vadd.f32 0.0, %v1386
        %v1388 = vpop.f32.mrf.mxu0
        %1389 = vdwg.mxu0
        %v1390 = vadd.f32 %v1376, %v1387
        %v1392 = vunpack.c.l.b16 %v1028
        %v1393 = vpack.c.b16 %v1392, %v1392
        %v1395 = vshrl.u32 %v1393, 16
        %v1397 = vshll.u32 %v1393, 16
        %v1399 = vrot.slane %v1397, 1
        %v1400 = vor.u32 %v1395, %v1399
        %v1402 = vsel %vm1046, %v1400, 0
        %1404 = vmatpush.bf16.msra.mxu0 0
        %1405 = vmatpush.bf16.msra.mxu0 0
        %1406 = vmatpush.bf16.msra.mxu0 0
        %1407 = vmatpush.bf16.msra.mxu0 0
        %1408 = vmatpush.bf16.msra.mxu0 0
        %1409 = vmatpush.bf16.msra.mxu0 0
        %1410 = vmatpush.bf16.msra.mxu0 %v1176
        %1411 = vmatpush.bf16.msra.mxu0 %v1175
        %1412 = vmatmul.bf16.gmra.mxu0 %v1402
        %v1413 = vpop.f32.mrf.mxu0
        %v1414 = vadd.f32 0.0, %v1413
        %v1415 = vpop.f32.mrf.mxu0
        %1416 = vdwg.mxu0
        %v1417 = vadd.f32 %v1390, %v1414
        %v1419 = vunpack.c.l.b16 %v1091
        %v1420 = vpack.c.b16 %v1419, %v1419
        %v1422 = vshrl.u32 %v1420, 16
        %v1424 = vshll.u32 %v1420, 16
        %v1426 = vrot.slane %v1424, 1
        %v1427 = vor.u32 %v1422, %v1426
        %v1429 = vsel %vm1046, %v1427, 0
        %1431 = vmatpush.bf16.msra.mxu0 0
        %1432 = vmatpush.bf16.msra.mxu0 0
        %1433 = vmatpush.bf16.msra.mxu0 0
        %1434 = vmatpush.bf16.msra.mxu0 0
        %1435 = vmatpush.bf16.msra.mxu0 0
        %1436 = vmatpush.bf16.msra.mxu0 0
        %1437 = vmatpush.bf16.msra.mxu0 %v1211
        %1438 = vmatpush.bf16.msra.mxu0 %v1210
        %1439 = vmatmul.bf16.gmra.mxu0 %v1429
        %v1440 = vpop.f32.mrf.mxu0
        %v1441 = vadd.f32 0.0, %v1440
        %v1442 = vpop.f32.mrf.mxu0
        %1443 = vdwg.mxu0
        %v1444 = vadd.f32 %v1417, %v1441
        %v1446 = vunpack.c.l.b16 %v1126
        %v1447 = vpack.c.b16 %v1446, %v1446
        %v1449 = vshrl.u32 %v1447, 16
        %v1451 = vshll.u32 %v1447, 16
        %v1453 = vrot.slane %v1451, 1
        %v1454 = vor.u32 %v1449, %v1453
        %v1456 = vsel %vm1046, %v1454, 0
        %1458 = vmatpush.bf16.msra.mxu0 0
        %1459 = vmatpush.bf16.msra.mxu0 0
        %1460 = vmatpush.bf16.msra.mxu0 0
        %1461 = vmatpush.bf16.msra.mxu0 0
        %1462 = vmatpush.bf16.msra.mxu0 0
        %1463 = vmatpush.bf16.msra.mxu0 0
        %1464 = vmatpush.bf16.msra.mxu0 %v1255
        %1465 = vmatpush.bf16.msra.mxu0 %v1254
        %1466 = vmatmul.bf16.gmra.mxu0 %v1456
        %v1467 = vpop.f32.mrf.mxu0
        %v1468 = vadd.f32 0.0, %v1467
        %v1469 = vpop.f32.mrf.mxu0
        %1470 = vdwg.mxu0
        %v1471 = vadd.f32 %v1444, %v1468
        %v1472 = vadd.f32 %v1471, %v1277
        %v1473 = vmul.f32 %v1472, 0.5
        %v1474 = vmul.f32 %v1472, 0.70710677
        %v1475 = vmul.f32 %v1474, %v1474
        %v1476 = vmin.f32 16.0, %v1475
        %v1477 = vmul.f32 %v1476, 2.1237322e-06
        %v1478 = vadd.f32 %v1477, 0.00028619796
        %v1479 = vmul.f32 %v1476, %v1478
        %v1480 = vadd.f32 %v1479, 0.0036580483
        %v1481 = vmul.f32 %v1476, %v1480
        %v1482 = vadd.f32 %v1481, 0.05243302
        %v1483 = vmul.f32 %v1476, %v1482
        %v1484 = vadd.f32 %v1483, 0.18741608
        %v1485 = vmul.f32 %v1476, %v1484
        %v1486 = vadd.f32 %v1485, 1.1283791
        %v1487 = vmul.f32 %v1474, %v1486
        %v1488 = vmul.f32 %v1476, 3.8918573e-05
        %v1489 = vadd.f32 %v1488, 0.001143296
        %v1490 = vmul.f32 %v1476, %v1489
        %v1491 = vadd.f32 %v1490, 0.014752088
        %v1492 = vmul.f32 %v1476, %v1491
        %v1493 = vadd.f32 %v1492, 0.112945676
        %v1494 = vmul.f32 %v1476, %v1493
        %v1495 = vadd.f32 %v1494, 0.4994258
        %v1496 = vmul.f32 %v1476, %v1495
        %v1497 = vadd.f32 %v1496, 1.0
        %v1498 = vrcp.pop %v1497
        %v1499 = vmul.f32 %v1497, %v1498
        %v1500 = vsub.f32 1.0, %v1499
        %v1501 = vmul.f32 %v1498, %v1500
        %v1502 = vadd.f32 %v1498, %v1501
        %vm1503 = vweird.f32 %v1497
        %vm1504 = vweird.f32 %v1498
        %vm1505 = vmor %vm1503, %vm1504
        %v1506 = vsel %vm1505, %v1498, %v1502
        %v1507 = vand.u32 2147483647, %v1497
        %vm1508 = vcmp.eq.f32.partialorder %v1507, 8.507059e+37
        %v1509 = vand.u32 %v1497, 2147483648
        %v1510 = vor.u32 1.1754944e-38, %v1509
        %v1511 = vsel %vm1508, %v1510, %v1506
        %v1512 = vmul.f32 %v1487, %v1511
        %v1513 = vmin.f32 %v1512, 1.0
        %v1514 = vmax.f32 %v1513, -1.0
        %v1515 = vadd.f32 %v1514, 1.0
        %v1516 = vmul.f32 %v1473, %v1515
        %v1517 = vpack.c.bf16 %v1516, %v1516
        %v1518 = vld [vmem:[%s6] sm:$0xf]
        %v1519 = vld [vmem:[%s6 + $0x4] sm:$0xf]
        %v1520 = vld [vmem:[%s6 + $0x8] sm:$0xf]
        %v1521 = vld [vmem:[%s6 + $0xc] sm:$0xf]
        %v1522 = vld [vmem:[%s6 + $0x10] sm:$0xf]
        %v1523 = vld [vmem:[%s6 + $0x14] sm:$0xf]
        %v1524 = vld [vmem:[%s6 + $0x18] sm:$0xf]
        %v1525 = vld [vmem:[%s6 + $0x1c] sm:$0xf]
        %s1526 = scalar_lea.vmem %s6, 32
        %v1527 = vld [vmem:[%s1526] sm:$0xf]
        %v1528 = vld [vmem:[%s1526 + $0x4] sm:$0xf]
        %v1529 = vld [vmem:[%s1526 + $0x8] sm:$0xf]
        %v1530 = vld [vmem:[%s1526 + $0xc] sm:$0xf]
        %v1531 = vld [vmem:[%s1526 + $0x10] sm:$0xf]
        %v1532 = vld [vmem:[%s1526 + $0x14] sm:$0xf]
        %v1533 = vld [vmem:[%s1526 + $0x18] sm:$0xf]
        %v1534 = vld [vmem:[%s1526 + $0x1c] sm:$0xf]
        %v1543 = vunpack.c.l.b16 %v1527
        %v1544 = vunpack.c.l.b16 %v1528
        %v1545 = vunpack.c.l.b16 %v1529
        %v1546 = vunpack.c.l.b16 %v1530
        %v1547 = vunpack.c.l.b16 %v1531
        %v1548 = vunpack.c.l.b16 %v1532
        %v1549 = vunpack.c.l.b16 %v1533
        %v1550 = vunpack.c.l.b16 %v1534
        %v1551 = vpack.c.b16 %v1544, %v1543
        %v1552 = vpack.c.b16 %v1546, %v1545
        %v1553 = vpack.c.b16 %v1548, %v1547
        %v1554 = vpack.c.b16 %v1550, %v1549
        %vm1559 = vcmask 523264
        %v1561 = vsel %vm1559, %v1517, 0
        %1563 = vmatpush.bf16.msra.mxu0 0
        %1564 = vmatpush.bf16.msra.mxu0 0
        %1565 = vmatpush.bf16.msra.mxu0 0
        %1566 = vmatpush.bf16.msra.mxu0 0
        %1567 = vmatpush.bf16.msra.mxu0 %v1554
        %1568 = vmatpush.bf16.msra.mxu0 %v1553
        %1569 = vmatpush.bf16.msra.mxu0 %v1552
        %1570 = vmatpush.bf16.msra.mxu0 %v1551
        %1571 = vmatmul.bf16.gmra.mxu0 %v1561
        %v1572 = vpop.f32.mrf.mxu0
        %v1573 = vadd.f32 0.0, %v1572
        %v1574 = vpop.f32.mrf.mxu0
        %1575 = vdwg.mxu0
        %v1584 = vunpack.c.l.b16 %v1518
        %v1585 = vunpack.c.l.b16 %v1519
        %v1586 = vunpack.c.l.b16 %v1520
        %v1587 = vunpack.c.l.b16 %v1521
        %v1588 = vunpack.c.l.b16 %v1522
        %v1589 = vunpack.c.l.b16 %v1523
        %v1590 = vunpack.c.l.b16 %v1524
        %v1591 = vunpack.c.l.b16 %v1525
        %v1592 = vpack.c.b16 %v1585, %v1584
        %v1593 = vpack.c.b16 %v1587, %v1586
        %v1594 = vpack.c.b16 %v1589, %v1588
        %v1595 = vpack.c.b16 %v1591, %v1590
        %v1601 = vsel %vm1559, %v1324, 0
        %1603 = vmatpush.bf16.msra.mxu0 0
        %1604 = vmatpush.bf16.msra.mxu0 0
        %1605 = vmatpush.bf16.msra.mxu0 0
        %1606 = vmatpush.bf16.msra.mxu0 0
        %1607 = vmatpush.bf16.msra.mxu0 %v1595
        %1608 = vmatpush.bf16.msra.mxu0 %v1594
        %1609 = vmatpush.bf16.msra.mxu0 %v1593
        %1610 = vmatpush.bf16.msra.mxu0 %v1592
        %1611 = vmatmul.bf16.gmra.mxu0 %v1601
        %v1612 = vpop.f32.mrf.mxu0
        %v1613 = vadd.f32 %v1573, %v1612
        %v1614 = vpop.f32.mrf.mxu0
        %1615 = vdwg.mxu0
        %s1616 = scalar_lea.vmem %s6, 64
        %v1617 = vld [vmem:[%s1616] sm:$0xf]
        %v1618 = vld [vmem:[%s1616 + $0x4] sm:$0xf]
        %v1619 = vld [vmem:[%s1616 + $0x8] sm:$0xf]
        %v1620 = vld [vmem:[%s1616 + $0xc] sm:$0xf]
        %v1621 = vld [vmem:[%s1616 + $0x10] sm:$0xf]
        %v1622 = vld [vmem:[%s1616 + $0x14] sm:$0xf]
        %v1623 = vld [vmem:[%s1616 + $0x18] sm:$0xf]
        %v1624 = vld [vmem:[%s1616 + $0x1c] sm:$0xf]
        %v1626 = vunpack.c.l.b16 %v1324
        %v1627 = vpack.c.b16 %v1626, %v1626
        %v1629 = vshrl.u32 %v1627, 16
        %v1631 = vshll.u32 %v1627, 16
        %v1633 = vrot.slane %v1631, 1
        %v1634 = vor.u32 %v1629, %v1633
        %v1643 = vunpack.c.l.b16 %v1617
        %v1644 = vunpack.c.l.b16 %v1618
        %v1645 = vunpack.c.l.b16 %v1619
        %v1646 = vunpack.c.l.b16 %v1620
        %v1647 = vunpack.c.l.b16 %v1621
        %v1648 = vunpack.c.l.b16 %v1622
        %v1649 = vunpack.c.l.b16 %v1623
        %v1650 = vunpack.c.l.b16 %v1624
        %v1651 = vpack.c.b16 %v1644, %v1643
        %v1652 = vpack.c.b16 %v1646, %v1645
        %v1653 = vpack.c.b16 %v1648, %v1647
        %v1654 = vpack.c.b16 %v1650, %v1649
        %v1660 = vsel %vm1559, %v1634, 0
        %1662 = vmatpush.bf16.msra.mxu0 0
        %1663 = vmatpush.bf16.msra.mxu0 0
        %1664 = vmatpush.bf16.msra.mxu0 0
        %1665 = vmatpush.bf16.msra.mxu0 0
        %1666 = vmatpush.bf16.msra.mxu0 %v1654
        %1667 = vmatpush.bf16.msra.mxu0 %v1653
        %1668 = vmatpush.bf16.msra.mxu0 %v1652
        %1669 = vmatpush.bf16.msra.mxu0 %v1651
        %1670 = vmatmul.bf16.gmra.mxu0 %v1660
        %v1671 = vpop.f32.mrf.mxu0
        %v1672 = vadd.f32 0.0, %v1671
        %v1673 = vpop.f32.mrf.mxu0
        %1674 = vdwg.mxu0
        %v1675 = vadd.f32 %v1613, %v1672
        %v1676 = vld [vmem:[%s7] sm:$0x1]
        %v1678 = vperm.slane %v1676, 0
        %v1680 = vadd.f32 %v1675, %v1678
        %v1681 = vmul.f32 %v1680, 0.5
        %v1682 = vmul.f32 %v1680, 0.70710677
        %v1683 = vmul.f32 %v1682, %v1682
        %v1684 = vmin.f32 16.0, %v1683
        %v1685 = vmul.f32 %v1684, 2.1237322e-06
        %v1686 = vadd.f32 %v1685, 0.00028619796
        %v1687 = vmul.f32 %v1684, %v1686
        %v1688 = vadd.f32 %v1687, 0.0036580483
        %v1689 = vmul.f32 %v1684, %v1688
        %v1690 = vadd.f32 %v1689, 0.05243302
        %v1691 = vmul.f32 %v1684, %v1690
        %v1692 = vadd.f32 %v1691, 0.18741608
        %v1693 = vmul.f32 %v1684, %v1692
        %v1694 = vadd.f32 %v1693, 1.1283791
        %v1695 = vmul.f32 %v1682, %v1694
        %v1696 = vmul.f32 %v1684, 3.8918573e-05
        %v1697 = vadd.f32 %v1696, 0.001143296
        %v1698 = vmul.f32 %v1684, %v1697
        %v1699 = vadd.f32 %v1698, 0.014752088
        %v1700 = vmul.f32 %v1684, %v1699
        %v1701 = vadd.f32 %v1700, 0.112945676
        %v1702 = vmul.f32 %v1684, %v1701
        %v1703 = vadd.f32 %v1702, 0.4994258
        %v1704 = vmul.f32 %v1684, %v1703
        %v1705 = vadd.f32 %v1704, 1.0
        %v1706 = vrcp.pop %v1705
        %v1707 = vmul.f32 %v1705, %v1706
        %v1708 = vsub.f32 1.0, %v1707
        %v1709 = vmul.f32 %v1706, %v1708
        %v1710 = vadd.f32 %v1706, %v1709
        %vm1711 = vweird.f32 %v1705
        %vm1712 = vweird.f32 %v1706
        %vm1713 = vmor %vm1711, %vm1712
        %v1714 = vsel %vm1713, %v1706, %v1710
        %v1715 = vand.u32 2147483647, %v1705
        %vm1716 = vcmp.eq.f32.partialorder %v1715, 8.507059e+37
        %v1717 = vand.u32 %v1705, 2147483648
        %v1718 = vor.u32 1.1754944e-38, %v1717
        %v1719 = vsel %vm1716, %v1718, %v1714
        %v1720 = vmul.f32 %v1695, %v1719
        %v1721 = vmin.f32 %v1720, 1.0
        %v1722 = vmax.f32 %v1721, -1.0
        %v1723 = vadd.f32 %v1722, 1.0
        %v1724 = vmul.f32 %v1681, %v1723
        %vm1725 = vcmask 257024
        %1726 = vst.msk [vmem:[%s298] sm:$0xf] %vm1725, %v1724
        %s1727 = sand.u32 %s203, 1
        %s1728 = scalar_lea.sflag [#allocation4], %s1727
        %s1729 = sand.u32 %s203, 1
        %s1730 = smul.addr %s1729, 4
        %s1731 = scalar_lea.vmem [#allocation3], %s1730
        // Predicated region
        $region53: #{tpu_custom_call.1} parent=51 // pred_check
          %p1732 = pneg %p213
        $region54: #{tpu_custom_call.1} parent=51 // pred_check_branch
          %1734 = sbr.rel (%p1732) target = $region56
        $region55: #{tpu_custom_call.1} parent=51 // pred_region
          %1736 = vsyncadd %s1728, 0
          %s1737 = smul.addr %s22, 4
          %s1738 = scalar_lea.hbm %s8, %s1737
          %s1740 = sshll.u32 %s1731, 4
          %s1741 = int_to_ptr.vmem [resolvable:$true] %s1740
          %s1742 = sshll.u32 %s1738, 4
          %s1743 = int_to_ptr.hbm [resolvable:$true] %s1742
          %1745 = dma.vmem_to_hbm [thread:$0]  %s1741, 64, %s1743, %s1728
        $region56: #{tpu_custom_call.1} parent=51 // pred_fallthru
          _
      $region52: #{tpu_custom_call.1} parent=5 // pred_fallthru
        _
      %p1746 = scmp.le.s32.totalorder 2, %s17
      // Predicated region
      $region57: #{tpu_custom_call.1} parent=5 // pred_check
        %p1747 = pneg %p1746
      $region58: #{tpu_custom_call.1} parent=5 // pred_check_branch
        %1749 = sbr.rel (%p1747) target = $region60
      $region59: #{tpu_custom_call.1} parent=5 // pred_region
        %s1750 = ssub.s32 %s17, 2
        // Predicated region
        $region61: #{tpu_custom_call.1} parent=59 // pred_check
          %p1751 = pneg %p219
        $region62: #{tpu_custom_call.1} parent=59 // pred_check_branch
          %1753 = sbr.rel (%p1751) target = $region64
        $region63: #{tpu_custom_call.1} parent=59 // pred_region
          %s1754 = sand.u32 %s204, 1
          %s1755 = scalar_lea.sflag [#allocation4], %s1754
          %s1756 = sand.u32 %s204, 1
          %s1757 = smul.addr %s1756, 4
          %s1758 = scalar_lea.vmem [#allocation3], %s1757
          %1760 = dma.done %s1755, 64
        $region64: #{tpu_custom_call.1} parent=59 // pred_fallthru
          _
      $region60: #{tpu_custom_call.1} parent=5 // pred_fallthru
        _
    $region6: #{tpu_custom_call.1} parent=1 // loop_footer
      %s21 = sadd.s32 1, %s17
    $region7: #{tpu_custom_call.1} parent=1 // loop_footer_branch
      %16 = sbr.rel target = $region3
    $region8: #{tpu_custom_call.1} parent=1 // loop_exit
      _
    %1761 = vsyncpa [#allocation4], 1
    %s1762 = scalar_lea.sflag [#allocation4], 1
    %1763 = vsyncpa %s1762, 1

</llo_original>
